<compile_context>
chip_gen: v7x
topology: tpu7x:2x2x1
jax: 0.10.0
libtpu: 0.0.40
codegen_flags: <defaults>
</compile_context>

<pallas_src>
import jax
import jax.numpy as jnp
from jax import lax
from jax.experimental import pallas as pl
from jax.experimental.pallas import tpu as pltpu

NUM_NODE_FEATURES = 12
NUM_EDGE_FEATURES = 3
HIDDEN = 32
TARGET = 1
NEG_SLOPE = 0.2          # GATConv LeakyReLU slope
NEG_BIG = -1.0e30        # finite "minus infinity" sentinel
DENOM_EPS = 1e-20
EDGE_TILE = 128          # edge tile; the (1, tE) row block forces a multiple of 128


def cohesion_gnn_kernel(
    edge_idx_ref,    # (tE, 2) int32   [src | dst] node ids (padded edges point at node N)
    dst_row_ref,     # (1, tE) int32   dst ids, row form (builds the scatter one-hot)
    a_edge_ref,      # (tE, 1) f32     edge-attr attention-logit term (folded in wrapper)
    xs_aug_ref,      # (N, H+1) bf16   [x @ W_src | 1]  (ones column carries the denom)
    adm_ref,         # (N, 2)  bf16    [xs @ att_dst | per-dst softmax max shift]
    att_src_ref,     # (H+1, 1) f32    [att_src ; 0]
    conv_b_ref,      # (1, H+1) f32    [GATConv bias | 0]
    gate_w_ref,      # (H+1, 1) f32    [gate Linear weight ; 0]
    gate_b_ref,      # (1, 1) f32
    batch_col_ref,   # (N, 1) int32    node -> graph id
    batch_row_ref,   # (1, N) int32    node -> graph id (row form)
    lin_w_ref,       # (H+1, 1) f32    [final Linear weight ; 0]
    lin_b_ref,       # (1, 1) f32
    out_ref,         # (G, 1) f32
    acc_ref,         # (N, H+1) f32 scratch: [sum_e a_e*x_src | sum_e a_e] per dst node
):
    f32 = jnp.float32
    bf16 = jnp.bfloat16
    i = pl.program_id(0)
    n_tiles = pl.num_programs(0)
    t_e = edge_idx_ref.shape[0]
    n_nodes = xs_aug_ref.shape[0]
    h_aug = xs_aug_ref.shape[1]            # H + 1
    hidden = h_aug - 1
    n_graphs = out_ref.shape[0]

    @pl.when(i == 0)
    def _init():
        acc_ref[...] = jnp.zeros_like(acc_ref)

    # ---- build one-hot tiles in-register from int32 indices (no E*N HBM traffic) ----
    eidx = edge_idx_ref[...]                                           # (tE, 2)
    src_col = eidx[:, 0:1]
    dst_col = eidx[:, 1:2]
    iota_en = lax.broadcasted_iota(jnp.int32, (t_e, n_nodes), 1)
    s_oh = (src_col == iota_en).astype(bf16)                           # (tE, N) gather-by-src
    d_oh = (dst_col == iota_en).astype(bf16)                           # (tE, N) gather-by-dst
    iota_ne = lax.broadcasted_iota(jnp.int32, (n_nodes, t_e), 0)
    dt_oh = (dst_row_ref[...] == iota_ne).astype(bf16)                 # (N, tE) scatter-to-dst

    # ---- GATConv attention logits + weighted messages for this edge tile ----
    xs_src = jnp.dot(s_oh, xs_aug_ref[...], preferred_element_type=f32)        # (tE, H+1)
    a_src_e = jnp.dot(xs_src, att_src_ref[...], preferred_element_type=f32)    # (tE, 1)
    dst_gath = jnp.dot(d_oh, adm_ref[...], preferred_element_type=f32)         # (tE, 2)
    alpha = a_src_e + dst_gath[:, 0:1] + a_edge_ref[...]
    alpha = jnp.where(alpha > 0, alpha, NEG_SLOPE * alpha)                      # LeakyReLU(0.2)
    ex = jnp.exp(alpha - dst_gath[:, 1:2])                                      # (tE, 1), ~<= 1

    # fused [weighted message | softmax denominator] scatter: one MXU pass over dt_oh
    payload = (ex * xs_src).astype(bf16)                                        # (tE, H+1)
    acc_ref[...] += jnp.dot(dt_oh, payload, preferred_element_type=f32)         # (N, H+1)

    # ---- finalize on the last edge tile: normalize, pool, regress ----
    @pl.when(i == n_tiles - 1)
    def _finalize():
        acc = acc_ref[...]
        denom = jnp.maximum(acc[:, hidden:h_aug], DENOM_EPS)                    # (N, 1)
        node_out = acc / denom                                                  # [conv out | 1]
        node_out = jnp.maximum(node_out + conv_b_ref[...], 0.0)                 # +bias, ReLU
        # F.dropout(p=0.5, training=False) -> identity

        # GlobalAttention pooling: gate Linear + per-graph segment softmax, same fused trick.
        gate = jnp.dot(node_out, gate_w_ref[...],
                       preferred_element_type=f32) + gate_b_ref[...]            # (N, 1)
        iota_ng = lax.broadcasted_iota(jnp.int32, (n_nodes, n_graphs), 1)
        b_mask = batch_col_ref[...] == iota_ng                                  # (N, G) bool
        m_g = jnp.max(jnp.where(b_mask, gate, NEG_BIG), axis=0, keepdims=True)  # (1, G)
        per_node_max = jnp.max(jnp.where(b_mask, m_g, NEG_BIG),
                               axis=1, keepdims=True)                           # (N, 1) exact gather
        eg = jnp.exp(gate - per_node_max)                                       # (N, 1), <= 1

        iota_gn = lax.broadcasted_iota(jnp.int32, (n_graphs, n_nodes), 0)
        bt_oh = (batch_row_ref[...] == iota_gn).astype(bf16)                    # (G, N)
        payload_g = (eg * node_out).astype(bf16)                                # (N, H+1)
        pooled = jnp.dot(bt_oh, payload_g, preferred_element_type=f32)          # (G, H+1)
        denom_g = jnp.maximum(pooled[:, hidden:h_aug], DENOM_EPS)               # (G, 1)
        pooled = pooled / denom_g                                               # [pooled | 1]

        out_ref[...] = (jnp.dot(pooled, lin_w_ref[...], preferred_element_type=f32)
                        + lin_b_ref[...])


def _vmem_limit_bytes(n_nodes, hidden, edge_tile):
    """Scoped-VMEM request from the tile working set, capped by the chip's real capacity."""
    lane = 128
    n_pad = -(-n_nodes // lane) * lane
    h_pad = -(-(hidden + 1) // lane) * lane
    tile = 3 * edge_tile * n_pad * 2        # S, D, DT one-hot tiles (bf16)
    tile += 3 * edge_tile * h_pad * 4       # xs_src / payload / per-edge temps (f32, lane padded)
    tile += n_pad * h_pad * 4               # accumulator scratch
    tile += 2 * 4 * edge_tile * 4           # double-buffered per-edge index / scalar blocks
    try:
        cap = int(pltpu.get_tpu_info().vmem_capacity_bytes)
    except Exception:                       # pragma: no cover - interpret mode / older runtimes
        cap = 64 * 1024 * 1024
    budget = cap - 16 * 1024 * 1024         # headroom for compiler scratch / stack
    want = max(32 * 1024 * 1024, 2 * tile)
    return int(max(4 * 1024 * 1024, min(want, budget)))


def cohesion_gnn_forward(x, edge_index, edge_attr, batch, params, num_graphs,
                         *, edge_tile=EDGE_TILE):
    """Scalar prep (self loops, folded edge path, softmax stability shift) + pallas_call."""
    f32, bf16 = jnp.float32, jnp.bfloat16
    n_nodes = x.shape[0]
    n_edges = edge_index.shape[1]
    hidden = params["w_src"].shape[1]
    target = params["lin_w"].shape[1]

    src = edge_index[0].astype(jnp.int32)
    dst = edge_index[1].astype(jnp.int32)

    # PyG GATConv: add_self_loops(fill_value='mean') -> self-loop attr = mean of incoming attrs.
    ones_e = jnp.ones((n_edges,), f32)
    in_deg = jax.ops.segment_sum(ones_e, dst, num_segments=n_nodes)
    attr_sum = jax.ops.segment_sum(edge_attr.astype(f32), dst, num_segments=n_nodes)
    loop_attr = attr_sum / jnp.maximum(in_deg, 1.0)[:, None]
    node_ids = jnp.arange(n_nodes, dtype=jnp.int32)
    src_full = jnp.concatenate([src, node_ids])
    dst_full = jnp.concatenate([dst, node_ids])
    edge_attr_full = jnp.concatenate([edge_attr.astype(f32), loop_attr], axis=0)
    e_total = n_edges + n_nodes

    # Cheap per-node / per-edge scalar prep (O(N*H + E)); the heavy gather/scatter stays in-kernel.
    xs = x.astype(f32) @ params["w_src"]                                   # (N, H)
    a_src_node = xs @ params["att_src"]                                    # (N, 1)
    a_dst_node = xs @ params["att_dst"]                                    # (N, 1)
    a_edge = edge_attr_full @ (params["w_edge"] @ params["att_edge"])      # (Et, 1) folded edge path
    # Per-destination max of the attention logit: numerical-stability shift only
    # (the softmax itself is computed in-kernel and is invariant to this constant).
    alpha_f32 = a_src_node[src_full, 0] + a_dst_node[dst_full, 0] + a_edge[:, 0]
    alpha_f32 = jnp.where(alpha_f32 > 0, alpha_f32, NEG_SLOPE * alpha_f32)
    m_node = jax.ops.segment_max(alpha_f32, dst_full, num_segments=n_nodes)
    m_node = jnp.maximum(m_node, NEG_BIG)                                  # finite for isolated nodes

    # Pad the edge list to whole tiles; padded edges use index N -> empty one-hot rows/cols.
    n_tiles = max(int(pl.cdiv(e_total, edge_tile)), 1)
    e_pad = n_tiles * edge_tile
    pad = e_pad - e_total
    pad_idx = jnp.full((pad,), n_nodes, jnp.int32)
    src_p = jnp.concatenate([src_full, pad_idx])
    dst_p = jnp.concatenate([dst_full, pad_idx])
    a_edge_p = jnp.concatenate([a_edge, jnp.zeros((pad, 1), f32)], axis=0)

    edge_idx = jnp.stack([src_p, dst_p], axis=1)                           # (E_pad, 2) int32
    dst_row = dst_p[None, :]                                               # (1, E_pad) int32

    zeros_row = jnp.zeros((1, 1), f32)
    xs_aug = jnp.concatenate([xs, jnp.ones((n_nodes, 1), f32)], axis=1).astype(bf16)      # (N, H+1)
    adm = jnp.concatenate([a_dst_node, m_node[:, None]], axis=1).astype(bf16)             # (N, 2)
    att_src_aug = jnp.concatenate([params["att_src"], zeros_row], axis=0)                 # (H+1, 1)
    conv_b_aug = jnp.concatenate([params["conv_b"], zeros_row], axis=1)                   # (1, H+1)
    gate_w_aug = jnp.concatenate([params["gate_w"], zeros_row], axis=0)                   # (H+1, 1)
    lin_w_aug = jnp.concatenate([params["lin_w"],
                                 jnp.zeros((1, target), f32)], axis=0)                    # (H+1, T)

    batch_i32 = batch.astype(jnp.int32)
    batch_col = batch_i32[:, None]
    batch_row = batch_i32[None, :]

    g = int(num_graphs)
    h_aug = hidden + 1
    t_e = edge_tile

    in_specs = [
        pl.BlockSpec((t_e, 2), lambda i: (i, 0)),        # edge_idx (streamed)
        pl.BlockSpec((1, t_e), lambda i: (0, i)),        # dst_row  (streamed)
        pl.BlockSpec((t_e, 1), lambda i: (i, 0)),        # a_edge   (streamed)
        pl.BlockSpec((n_nodes, h_aug), lambda i: (0, 0)),    # xs_aug (resident)
        pl.BlockSpec((n_nodes, 2), lambda i: (0, 0)),        # adm    (resident)
        pl.BlockSpec((h_aug, 1), lambda i: (0, 0)),          # att_src_aug
        pl.BlockSpec((1, h_aug), lambda i: (0, 0)),          # conv_b_aug
        pl.BlockSpec((h_aug, 1), lambda i: (0, 0)),          # gate_w_aug
        pl.BlockSpec((1, 1), lambda i: (0, 0)),              # gate_b
        pl.BlockSpec((n_nodes, 1), lambda i: (0, 0)),        # batch_col
        pl.BlockSpec((1, n_nodes), lambda i: (0, 0)),        # batch_row
        pl.BlockSpec((h_aug, target), lambda i: (0, 0)),     # lin_w_aug
        pl.BlockSpec((1, target), lambda i: (0, 0)),         # lin_b
    ]
    out_specs = pl.BlockSpec((g, target), lambda i: (0, 0))

    kernel = pl.pallas_call(
        cohesion_gnn_kernel,
        out_shape=jax.ShapeDtypeStruct((g, target), f32),
        grid=(n_tiles,),
        in_specs=in_specs,
        out_specs=out_specs,
        scratch_shapes=[pltpu.VMEM((n_nodes, h_aug), f32)],
        compiler_params=pltpu.CompilerParams(
            dimension_semantics=("arbitrary",),
            vmem_limit_bytes=_vmem_limit_bytes(n_nodes, hidden, edge_tile)),
    )
    return kernel(edge_idx, dst_row, a_edge_p, xs_aug, adm, att_src_aug,
                  conv_b_aug, gate_w_aug, params["gate_b"], batch_col, batch_row,
                  lin_w_aug, params["lin_b"])


def gnn_reference(x, edge_index, edge_attr, batch, params, num_graphs):
    """Pure-JAX f32 reference mirroring the PyTorch module (eval mode, heads=1)."""
    n_nodes = x.shape[0]
    n_edges = edge_index.shape[1]
    src, dst = edge_index[0], edge_index[1]
    ones_e = jnp.ones((n_edges,), jnp.float32)
    deg = jax.ops.segment_sum(ones_e, dst, num_segments=n_nodes)
    attr_sum = jax.ops.segment_sum(edge_attr, dst, num_segments=n_nodes)
    loop_attr = attr_sum / jnp.maximum(deg, 1.0)[:, None]
    node_ids = jnp.arange(n_nodes, dtype=jnp.int32)
    src_f = jnp.concatenate([src, node_ids])
    dst_f = jnp.concatenate([dst, node_ids])
    ea = jnp.concatenate([edge_attr, loop_attr], axis=0)

    xs = x @ params["w_src"]
    a_src = (xs @ params["att_src"])[:, 0]
    a_dst = (xs @ params["att_dst"])[:, 0]
    a_edge = (ea @ params["w_edge"] @ params["att_edge"])[:, 0]
    alpha = a_src[src_f] + a_dst[dst_f] + a_edge
    alpha = jnp.where(alpha > 0, alpha, NEG_SLOPE * alpha)
    m = jax.ops.segment_max(alpha, dst_f, num_segments=n_nodes)
    ex = jnp.exp(alpha - m[dst_f])
    den = jax.ops.segment_sum(ex, dst_f, num_segments=n_nodes)
    attn = ex / den[dst_f]
    node_out = jax.ops.segment_sum(attn[:, None] * xs[src_f], dst_f, num_segments=n_nodes)
    node_out = jnp.maximum(node_out + params["conv_b"], 0.0)

    gate = (node_out @ params["gate_w"] + params["gate_b"])[:, 0]
    mg = jax.ops.segment_max(gate, batch, num_segments=num_graphs)
    eg = jnp.exp(gate - mg[batch])
    dg = jax.ops.segment_sum(eg, batch, num_segments=num_graphs)
    gsm = eg / dg[batch]
    pooled = jax.ops.segment_sum(gsm[:, None] * node_out, batch, num_segments=num_graphs)
    return pooled @ params["lin_w"] + params["lin_b"]


def init_params(key, num_features=NUM_NODE_FEATURES, hidden=HIDDEN,
                edge_dim=NUM_EDGE_FEATURES, target=TARGET):
    ks = jax.random.split(key, 7)
    s = 0.1
    return {
        "w_src":    (s * jax.random.normal(ks[0], (num_features, hidden))).astype(jnp.float32),
        "att_src":  (s * jax.random.normal(ks[1], (hidden, 1))).astype(jnp.float32),
        "att_dst":  (s * jax.random.normal(ks[2], (hidden, 1))).astype(jnp.float32),
        "w_edge":   (s * jax.random.normal(ks[3], (edge_dim, hidden))).astype(jnp.float32),
        "att_edge": (s * jax.random.normal(ks[4], (hidden, 1))).astype(jnp.float32),
        "conv_b":   jnp.zeros((1, hidden), jnp.float32),
        "gate_w":   (s * jax.random.normal(ks[5], (hidden, 1))).astype(jnp.float32),
        "gate_b":   jnp.zeros((1, 1), jnp.float32),
        "lin_w":    (s * jax.random.normal(ks[6], (hidden, target))).astype(jnp.float32),
        "lin_b":    jnp.zeros((1, target), jnp.float32),
    }


if __name__ == "__main__":
    key = jax.random.PRNGKey(0)
    k_x, k_e, k_p = jax.random.split(key, 3)

    # Small deterministic batch: 3 graphs x 10 nodes, 5 out-edges per node
    # -> 150 edges + 30 self-loops = 180 edges = 2 edge tiles of 128 (exercises the pipeline).
    num_graphs = 3
    nodes_per_graph = 10
    n_nodes = num_graphs * nodes_per_graph

    x = jax.random.normal(k_x, (n_nodes, NUM_NODE_FEATURES), dtype=jnp.float32)
    batch = jnp.repeat(jnp.arange(num_graphs, dtype=jnp.int32), nodes_per_graph)

    srcs, dsts = [], []
    for gi in range(num_graphs):
        base = gi * nodes_per_graph
        for ni in range(nodes_per_graph):
            for off in range(1, 6):
                srcs.append(base + ni)
                dsts.append(base + (ni + off) % nodes_per_graph)
    edge_index = jnp.array([srcs, dsts], dtype=jnp.int32)          # (2, 150)
    edge_attr = jax.random.normal(k_e, (edge_index.shape[1], NUM_EDGE_FEATURES),
                                  dtype=jnp.float32)

    params = init_params(k_p)

    out = cohesion_gnn_forward(x, edge_index, edge_attr, batch, params, num_graphs)
    out = jax.block_until_ready(out)
    ref = gnn_reference(x, edge_index, edge_attr, batch, params, num_graphs)

    assert out.shape == (num_graphs, TARGET)
    assert bool(jnp.all(jnp.isfinite(out)))
    assert bool(jnp.allclose(out, ref, atol=5e-2, rtol=5e-2)), (out, ref)
    print("KERNEL_OK")
</pallas_src>

<mosaic_0001>
module attributes {stable_mosaic.version = 11 : i64} {
  func.func @cohesion_gnn_kernel(%arg0: i32, %arg1: memref<128x2xi32, #tpu.memory_space<vmem>>, %arg2: memref<1x128xi32, #tpu.memory_space<vmem>>, %arg3: memref<128x1xf32, #tpu.memory_space<vmem>>, %arg4: memref<30x33xbf16, #tpu.memory_space<vmem>>, %arg5: memref<30x2xbf16, #tpu.memory_space<vmem>>, %arg6: memref<33x1xf32, #tpu.memory_space<vmem>>, %arg7: memref<1x33xf32, #tpu.memory_space<vmem>>, %arg8: memref<33x1xf32, #tpu.memory_space<vmem>>, %arg9: memref<1x1xf32, #tpu.memory_space<vmem>>, %arg10: memref<30x1xi32, #tpu.memory_space<vmem>>, %arg11: memref<1x30xi32, #tpu.memory_space<vmem>>, %arg12: memref<33x1xf32, #tpu.memory_space<vmem>>, %arg13: memref<1x1xf32, #tpu.memory_space<vmem>>, %arg14: memref<3x1xf32, #tpu.memory_space<vmem>>, %arg15: memref<30x33xf32, #tpu.memory_space<vmem>>) attributes {dimension_semantics = [#tpu.dimension_semantics<arbitrary>], iteration_bounds = array<i64: 2>, scalar_prefetch = 0 : i64, scratch_operands = 1 : i64, tpu.core_type = #tpu.core_type<tc>, window_params = [{transform_indices = @transform_0, window_bounds = array<i64: 128, 2>}, {transform_indices = @transform_1, window_bounds = array<i64: 1, 128>}, {transform_indices = @transform_2, window_bounds = array<i64: 128, 1>}, {pipeline_mode = #tpu.pipeline_mode<synchronous>, transform_indices = @transform_3, window_bounds = array<i64: 30, 33>}, {pipeline_mode = #tpu.pipeline_mode<synchronous>, transform_indices = @transform_4, window_bounds = array<i64: 30, 2>}, {pipeline_mode = #tpu.pipeline_mode<synchronous>, transform_indices = @transform_5, window_bounds = array<i64: 33, 1>}, {pipeline_mode = #tpu.pipeline_mode<synchronous>, transform_indices = @transform_6, window_bounds = array<i64: 1, 33>}, {pipeline_mode = #tpu.pipeline_mode<synchronous>, transform_indices = @transform_7, window_bounds = array<i64: 33, 1>}, {pipeline_mode = #tpu.pipeline_mode<synchronous>, transform_indices = @transform_8, window_bounds = array<i64: 1, 1>}, {pipeline_mode = #tpu.pipeline_mode<synchronous>, transform_indices = @transform_9, window_bounds = array<i64: 30, 1>}, {pipeline_mode = #tpu.pipeline_mode<synchronous>, transform_indices = @transform_10, window_bounds = array<i64: 1, 30>}, {pipeline_mode = #tpu.pipeline_mode<synchronous>, transform_indices = @transform_11, window_bounds = array<i64: 33, 1>}, {pipeline_mode = #tpu.pipeline_mode<synchronous>, transform_indices = @transform_12, window_bounds = array<i64: 1, 1>}, {pipeline_mode = #tpu.pipeline_mode<synchronous>, transform_indices = @transform_13, window_bounds = array<i64: 3, 1>}]} {
    %c0_i32 = arith.constant 0 : i32
    %0 = arith.cmpi eq, %arg0, %c0_i32 : i32
    %1 = arith.extui %0 : i1 to i32
    %c0_i32_0 = arith.constant 0 : i32
    %2 = arith.cmpi ne, %1, %c0_i32_0 : i32
    scf.if %2 {
      %cst_22 = arith.constant 0.000000e+00 : f32
      %52 = vector.broadcast %cst_22 : f32 to vector<30x33xf32>
      %c0_23 = arith.constant 0 : index
      %c0_24 = arith.constant 0 : index
      %53 = vector.load %arg15[%c0_23, %c0_24] : memref<30x33xf32, #tpu.memory_space<vmem>>, vector<30x33xf32>
      tpu.vector_store %arg15[%c0_23, %c0_24], %52 {strides = array<i32>} : memref<30x33xf32, #tpu.memory_space<vmem>>, vector<30x33xf32>,
    } else {
    }
    %c0 = arith.constant 0 : index
    %c0_1 = arith.constant 0 : index
    %3 = vector.load %arg1[%c0, %c0_1] : memref<128x2xi32, #tpu.memory_space<vmem>>, vector<128x2xi32>
    %4 = vector.extract_strided_slice %3 {offsets = [0, 0], sizes = [128, 1], strides = [1, 1]} : vector<128x2xi32> to vector<128x1xi32>
    %5 = vector.extract_strided_slice %3 {offsets = [0, 1], sizes = [128, 1], strides = [1, 1]} : vector<128x2xi32> to vector<128x1xi32>
    %6 = tpu.iota {dimensions = array<i32: 1>} : vector<128x30xi32>
    %7 = vector.broadcast %4 : vector<128x1xi32> to vector<128x30xi32>
    %8 = arith.cmpi eq, %7, %6 : vector<128x30xi32>
    %9 = arith.extui %8 : vector<128x30xi1> to vector<128x30xi32>
    %10 = arith.sitofp %9 : vector<128x30xi32> to vector<128x30xf32>
    %11 = arith.truncf %10 : vector<128x30xf32> to vector<128x30xbf16>
    %12 = vector.broadcast %5 : vector<128x1xi32> to vector<128x30xi32>
    %13 = arith.cmpi eq, %12, %6 : vector<128x30xi32>
    %14 = arith.extui %13 : vector<128x30xi1> to vector<128x30xi32>
    %15 = arith.sitofp %14 : vector<128x30xi32> to vector<128x30xf32>
    %16 = arith.truncf %15 : vector<128x30xf32> to vector<128x30xbf16>
    %17 = tpu.iota {dimensions = array<i32: 0>} : vector<30x128xi32>
    %c0_2 = arith.constant 0 : index
    %c0_3 = arith.constant 0 : index
    %18 = vector.load %arg2[%c0_2, %c0_3] : memref<1x128xi32, #tpu.memory_space<vmem>>, vector<1x128xi32>
    %19 = vector.broadcast %18 : vector<1x128xi32> to vector<30x128xi32>
    %20 = arith.cmpi eq, %19, %17 : vector<30x128xi32>
    %21 = arith.extui %20 : vector<30x128xi1> to vector<30x128xi32>
    %22 = arith.sitofp %21 : vector<30x128xi32> to vector<30x128xf32>
    %23 = arith.truncf %22 : vector<30x128xf32> to vector<30x128xbf16>
    %c0_4 = arith.constant 0 : index
    %c0_5 = arith.constant 0 : index
    %24 = vector.load %arg4[%c0_4, %c0_5] : memref<30x33xbf16, #tpu.memory_space<vmem>>, vector<30x33xbf16>
    %cst = arith.constant dense<0.000000e+00> : vector<128x33xf32>
    %25 = tpu.matmul %11, %24, %cst {dimension_numbers = #tpu.dot_dimension_numbers<[1], [0], [0], [1], [0, 0, 1, 1], [], []>} : vector<128x30xbf16>, vector<30x33xbf16>, vector<128x33xf32> -> vector<128x33xf32>
    %c0_6 = arith.constant 0 : index
    %c0_7 = arith.constant 0 : index
    %26 = vector.load %arg6[%c0_6, %c0_7] : memref<33x1xf32, #tpu.memory_space<vmem>>, vector<33x1xf32>
    %cst_8 = arith.constant dense<0.000000e+00> : vector<128x1xf32>
    %27 = tpu.matmul %25, %26, %cst_8 {dimension_numbers = #tpu.dot_dimension_numbers<[1], [0], [0], [1], [0, 0, 1, 1], [], []>} : vector<128x33xf32>, vector<33x1xf32>, vector<128x1xf32> -> vector<128x1xf32>
    %c0_9 = arith.constant 0 : index
    %c0_10 = arith.constant 0 : index
    %28 = vector.load %arg5[%c0_9, %c0_10] : memref<30x2xbf16, #tpu.memory_space<vmem>>, vector<30x2xbf16>
    %cst_11 = arith.constant dense<0.000000e+00> : vector<128x2xf32>
    %29 = tpu.matmul %16, %28, %cst_11 {dimension_numbers = #tpu.dot_dimension_numbers<[1], [0], [0], [1], [0, 0, 1, 1], [], []>} : vector<128x30xbf16>, vector<30x2xbf16>, vector<128x2xf32> -> vector<128x2xf32>
    %30 = vector.extract_strided_slice %29 {offsets = [0, 0], sizes = [128, 1], strides = [1, 1]} : vector<128x2xf32> to vector<128x1xf32>
    %31 = arith.addf %27, %30 : vector<128x1xf32>
    %c0_12 = arith.constant 0 : index
    %c0_13 = arith.constant 0 : index
    %32 = vector.load %arg3[%c0_12, %c0_13] : memref<128x1xf32, #tpu.memory_space<vmem>>, vector<128x1xf32>
    %33 = arith.addf %31, %32 : vector<128x1xf32>
    %cst_14 = arith.constant 0.000000e+00 : f32
    %34 = vector.broadcast %cst_14 : f32 to vector<128x1xf32>
    %35 = arith.cmpf ogt, %33, %34 : vector<128x1xf32>
    %cst_15 = arith.constant 2.000000e-01 : f32
    %36 = vector.broadcast %cst_15 : f32 to vector<128x1xf32>
    %37 = arith.mulf %36, %33 : vector<128x1xf32>
    %38 = arith.select %35, %33, %37 : vector<128x1xi1>, vector<128x1xf32>
    %39 = vector.extract_strided_slice %29 {offsets = [0, 1], sizes = [128, 1], strides = [1, 1]} : vector<128x2xf32> to vector<128x1xf32>
    %40 = arith.subf %38, %39 : vector<128x1xf32>
    %41 = math.exp %40 : vector<128x1xf32>
    %42 = vector.broadcast %41 : vector<128x1xf32> to vector<128x33xf32>
    %43 = arith.mulf %42, %25 : vector<128x33xf32>
    %44 = arith.truncf %43 : vector<128x33xf32> to vector<128x33xbf16>
    %c0_16 = arith.constant 0 : index
    %c0_17 = arith.constant 0 : index
    %45 = vector.load %arg15[%c0_16, %c0_17] : memref<30x33xf32, #tpu.memory_space<vmem>>, vector<30x33xf32>
    %cst_18 = arith.constant dense<0.000000e+00> : vector<30x33xf32>
    %46 = tpu.matmul %23, %44, %cst_18 {dimension_numbers = #tpu.dot_dimension_numbers<[1], [0], [0], [1], [0, 0, 1, 1], [], []>} : vector<30x128xbf16>, vector<128x33xbf16>, vector<30x33xf32> -> vector<30x33xf32>
    %47 = arith.addf %45, %46 : vector<30x33xf32>
    %c0_19 = arith.constant 0 : index
    %c0_20 = arith.constant 0 : index
    %48 = vector.load %arg15[%c0_19, %c0_20] : memref<30x33xf32, #tpu.memory_space<vmem>>, vector<30x33xf32>
    tpu.vector_store %arg15[%c0_19, %c0_20], %47 {strides = array<i32>} : memref<30x33xf32, #tpu.memory_space<vmem>>, vector<30x33xf32>,
    %c1_i32 = arith.constant 1 : i32
    %49 = arith.cmpi eq, %arg0, %c1_i32 : i32
    %50 = arith.extui %49 : i1 to i32
    %c0_i32_21 = arith.constant 0 : i32
    %51 = arith.cmpi ne, %50, %c0_i32_21 : i32
    scf.if %51 {
      %c0_22 = arith.constant 0 : index
      %c0_23 = arith.constant 0 : index
      %52 = vector.load %arg15[%c0_22, %c0_23] : memref<30x33xf32, #tpu.memory_space<vmem>>, vector<30x33xf32>
      %53 = vector.extract_strided_slice %52 {offsets = [0, 32], sizes = [30, 1], strides = [1, 1]} : vector<30x33xf32> to vector<30x1xf32>
      %cst_24 = arith.constant 9.99999968E-21 : f32
      %54 = vector.broadcast %cst_24 : f32 to vector<30x1xf32>
      %55 = arith.maximumf %53, %54 : vector<30x1xf32>
      %56 = vector.broadcast %55 : vector<30x1xf32> to vector<30x33xf32>
      %57 = arith.divf %52, %56 : vector<30x33xf32>
      %c0_25 = arith.constant 0 : index
      %c0_26 = arith.constant 0 : index
      %58 = vector.load %arg7[%c0_25, %c0_26] : memref<1x33xf32, #tpu.memory_space<vmem>>, vector<1x33xf32>
      %59 = vector.broadcast %58 : vector<1x33xf32> to vector<30x33xf32>
      %60 = arith.addf %57, %59 : vector<30x33xf32>
      %cst_27 = arith.constant 0.000000e+00 : f32
      %61 = vector.broadcast %cst_27 : f32 to vector<30x33xf32>
      %62 = arith.maximumf %60, %61 : vector<30x33xf32>
      %c0_28 = arith.constant 0 : index
      %c0_29 = arith.constant 0 : index
      %63 = vector.load %arg8[%c0_28, %c0_29] : memref<33x1xf32, #tpu.memory_space<vmem>>, vector<33x1xf32>
      %cst_30 = arith.constant dense<0.000000e+00> : vector<30x1xf32>
      %64 = tpu.matmul %62, %63, %cst_30 {dimension_numbers = #tpu.dot_dimension_numbers<[1], [0], [0], [1], [0, 0, 1, 1], [], []>} : vector<30x33xf32>, vector<33x1xf32>, vector<30x1xf32> -> vector<30x1xf32>
      %c0_31 = arith.constant 0 : index
      %c0_32 = arith.constant 0 : index
      %65 = vector.load %arg9[%c0_31, %c0_32] : memref<1x1xf32, #tpu.memory_space<vmem>>, vector<1x1xf32>
      %66 = vector.broadcast %65 : vector<1x1xf32> to vector<30x1xf32>
      %67 = arith.addf %64, %66 : vector<30x1xf32>
      %68 = tpu.iota {dimensions = array<i32: 1>} : vector<30x3xi32>
      %c0_33 = arith.constant 0 : index
      %c0_34 = arith.constant 0 : index
      %69 = vector.load %arg10[%c0_33, %c0_34] : memref<30x1xi32, #tpu.memory_space<vmem>>, vector<30x1xi32>
      %70 = vector.broadcast %69 : vector<30x1xi32> to vector<30x3xi32>
      %71 = arith.cmpi eq, %70, %68 : vector<30x3xi32>
      %cst_35 = arith.constant -1.000000e+30 : f32
      %72 = vector.shape_cast %67 : vector<30x1xf32> to vector<30x1xf32>
      %73 = vector.broadcast %72 : vector<30x1xf32> to vector<30x3xf32>
      %74 = vector.broadcast %cst_35 : f32 to vector<30x3xf32>
      %75 = arith.select %71, %73, %74 : vector<30x3xi1>, vector<30x3xf32>
      %cst_36 = arith.constant dense<0xFF800000> : vector<3xf32>
      %76 = vector.multi_reduction <maximumf>, %75, %cst_36 [0] : vector<30x3xf32> to vector<3xf32>
      %77 = vector.shape_cast %76 : vector<3xf32> to vector<1x3xf32>
      %cst_37 = arith.constant -1.000000e+30 : f32
      %78 = vector.shape_cast %77 : vector<1x3xf32> to vector<1x3xf32>
      %79 = vector.broadcast %78 : vector<1x3xf32> to vector<30x3xf32>
      %80 = vector.broadcast %cst_37 : f32 to vector<30x3xf32>
      %81 = arith.select %71, %79, %80 : vector<30x3xi1>, vector<30x3xf32>
      %cst_38 = arith.constant dense<0xFF800000> : vector<30xf32>
      %82 = vector.multi_reduction <maximumf>, %81, %cst_38 [1] : vector<30x3xf32> to vector<30xf32>
      %83 = vector.shape_cast %82 : vector<30xf32> to vector<30x1xf32>
      %84 = arith.subf %67, %83 : vector<30x1xf32>
      %85 = math.exp %84 : vector<30x1xf32>
      %86 = tpu.iota {dimensions = array<i32: 0>} : vector<3x30xi32>
      %c0_39 = arith.constant 0 : index
      %c0_40 = arith.constant 0 : index
      %87 = vector.load %arg11[%c0_39, %c0_40] : memref<1x30xi32, #tpu.memory_space<vmem>>, vector<1x30xi32>
      %88 = vector.broadcast %87 : vector<1x30xi32> to vector<3x30xi32>
      %89 = arith.cmpi eq, %88, %86 : vector<3x30xi32>
      %90 = arith.extui %89 : vector<3x30xi1> to vector<3x30xi32>
      %91 = arith.sitofp %90 : vector<3x30xi32> to vector<3x30xf32>
      %92 = arith.truncf %91 : vector<3x30xf32> to vector<3x30xbf16>
      %93 = vector.broadcast %85 : vector<30x1xf32> to vector<30x33xf32>
      %94 = arith.mulf %93, %62 : vector<30x33xf32>
      %95 = arith.truncf %94 : vector<30x33xf32> to vector<30x33xbf16>
      %cst_41 = arith.constant dense<0.000000e+00> : vector<3x33xf32>
      %96 = tpu.matmul %92, %95, %cst_41 {dimension_numbers = #tpu.dot_dimension_numbers<[1], [0], [0], [1], [0, 0, 1, 1], [], []>} : vector<3x30xbf16>, vector<30x33xbf16>, vector<3x33xf32> -> vector<3x33xf32>
      %97 = vector.extract_strided_slice %96 {offsets = [0, 32], sizes = [3, 1], strides = [1, 1]} : vector<3x33xf32> to vector<3x1xf32>
      %cst_42 = arith.constant 9.99999968E-21 : f32
      %98 = vector.broadcast %cst_42 : f32 to vector<3x1xf32>
      %99 = arith.maximumf %97, %98 : vector<3x1xf32>
      %100 = vector.broadcast %99 : vector<3x1xf32> to vector<3x33xf32>
      %101 = arith.divf %96, %100 : vector<3x33xf32>
      %c0_43 = arith.constant 0 : index
      %c0_44 = arith.constant 0 : index
      %102 = vector.load %arg12[%c0_43, %c0_44] : memref<33x1xf32, #tpu.memory_space<vmem>>, vector<33x1xf32>
      %cst_45 = arith.constant dense<0.000000e+00> : vector<3x1xf32>
      %103 = tpu.matmul %101, %102, %cst_45 {dimension_numbers = #tpu.dot_dimension_numbers<[1], [0], [0], [1], [0, 0, 1, 1], [], []>} : vector<3x33xf32>, vector<33x1xf32>, vector<3x1xf32> -> vector<3x1xf32>
      %c0_46 = arith.constant 0 : index
      %c0_47 = arith.constant 0 : index
      %104 = vector.load %arg13[%c0_46, %c0_47] : memref<1x1xf32, #tpu.memory_space<vmem>>, vector<1x1xf32>
      %105 = vector.broadcast %104 : vector<1x1xf32> to vector<3x1xf32>
      %106 = arith.addf %103, %105 : vector<3x1xf32>
      %c0_48 = arith.constant 0 : index
      %c0_49 = arith.constant 0 : index
      %107 = vector.load %arg14[%c0_48, %c0_49] : memref<3x1xf32, #tpu.memory_space<vmem>>, vector<3x1xf32>
      tpu.vector_store %arg14[%c0_48, %c0_49], %106 {strides = array<i32>} : memref<3x1xf32, #tpu.memory_space<vmem>>, vector<3x1xf32>,
    } else {
    }
    return
  }
  func.func @transform_0(%arg0: i32) -> (i32, i32) {
    %c0_i32 = arith.constant 0 : i32
    %c0_i32_0 = arith.constant 0 : i32
    return %arg0, %c0_i32 : i32, i32
  }
  func.func @transform_1(%arg0: i32) -> (i32, i32) {
    %c0_i32 = arith.constant 0 : i32
    %c0_i32_0 = arith.constant 0 : i32
    return %c0_i32, %arg0 : i32, i32
  }
  func.func @transform_2(%arg0: i32) -> (i32, i32) {
    %c0_i32 = arith.constant 0 : i32
    %c0_i32_0 = arith.constant 0 : i32
    return %arg0, %c0_i32 : i32, i32
  }
  func.func @transform_3(%arg0: i32) -> (i32, i32) {
    %c0_i32 = arith.constant 0 : i32
    %c0_i32_0 = arith.constant 0 : i32
    %c0_i32_1 = arith.constant 0 : i32
    return %c0_i32, %c0_i32_0 : i32, i32
  }
  func.func @transform_4(%arg0: i32) -> (i32, i32) {
    %c0_i32 = arith.constant 0 : i32
    %c0_i32_0 = arith.constant 0 : i32
    %c0_i32_1 = arith.constant 0 : i32
    return %c0_i32, %c0_i32_0 : i32, i32
  }
  func.func @transform_5(%arg0: i32) -> (i32, i32) {
    %c0_i32 = arith.constant 0 : i32
    %c0_i32_0 = arith.constant 0 : i32
    %c0_i32_1 = arith.constant 0 : i32
    return %c0_i32, %c0_i32_0 : i32, i32
  }
  func.func @transform_6(%arg0: i32) -> (i32, i32) {
    %c0_i32 = arith.constant 0 : i32
    %c0_i32_0 = arith.constant 0 : i32
    %c0_i32_1 = arith.constant 0 : i32
    return %c0_i32, %c0_i32_0 : i32, i32
  }
  func.func @transform_7(%arg0: i32) -> (i32, i32) {
    %c0_i32 = arith.constant 0 : i32
    %c0_i32_0 = arith.constant 0 : i32
    %c0_i32_1 = arith.constant 0 : i32
    return %c0_i32, %c0_i32_0 : i32, i32
  }
  func.func @transform_8(%arg0: i32) -> (i32, i32) {
    %c0_i32 = arith.constant 0 : i32
    %c0_i32_0 = arith.constant 0 : i32
    %c0_i32_1 = arith.constant 0 : i32
    return %c0_i32, %c0_i32_0 : i32, i32
  }
  func.func @transform_9(%arg0: i32) -> (i32, i32) {
    %c0_i32 = arith.constant 0 : i32
    %c0_i32_0 = arith.constant 0 : i32
    %c0_i32_1 = arith.constant 0 : i32
    return %c0_i32, %c0_i32_0 : i32, i32
  }
  func.func @transform_10(%arg0: i32) -> (i32, i32) {
    %c0_i32 = arith.constant 0 : i32
    %c0_i32_0 = arith.constant 0 : i32
    %c0_i32_1 = arith.constant 0 : i32
    return %c0_i32, %c0_i32_0 : i32, i32
  }
  func.func @transform_11(%arg0: i32) -> (i32, i32) {
    %c0_i32 = arith.constant 0 : i32
    %c0_i32_0 = arith.constant 0 : i32
    %c0_i32_1 = arith.constant 0 : i32
    return %c0_i32, %c0_i32_0 : i32, i32
  }
  func.func @transform_12(%arg0: i32) -> (i32, i32) {
    %c0_i32 = arith.constant 0 : i32
    %c0_i32_0 = arith.constant 0 : i32
    %c0_i32_1 = arith.constant 0 : i32
    return %c0_i32, %c0_i32_0 : i32, i32
  }
  func.func @transform_13(%arg0: i32) -> (i32, i32) {
    %c0_i32 = arith.constant 0 : i32
    %c0_i32_0 = arith.constant 0 : i32
    %c0_i32_1 = arith.constant 0 : i32
    return %c0_i32, %c0_i32_0 : i32, i32
  }
}

</mosaic_0001>

<llo_original>
// kernel: tpu_custom_call.1
$region0: #{tpu_custom_call.1}
  #allocation0 [shape = 'u32[]', space=smem, size = 0x4, offset = 0x4, fixed_abs, tag = 'smem constant byte address 0x4 - core index']
  #allocation1 [shape = 'u32[144,128]{1,0:T(1,128)}', space=vmem, size = 0x12000, scoped, tag = 'internal scratch']
  #allocation2 [shape = 'f32[30,33]{1,0:T(8,128)}', space=vmem, size = 0x4000, scoped, tag = 'scratch operand']
  #allocation3 [shape = 'f32[1,1]{1,0:T(1,128)S(1)}', space=vmem, size = 0x200, scoped, tag = 'scoped memory for tpu_custom_call.1']
  #allocation4 [shape = 'f32[1,1]{1,0:T(1,128)S(1)}', space=vmem, size = 0x200, scoped, tag = 'scoped memory for tpu_custom_call.1']
  %s0 = inlined_call_operand.vmem [shape: s32[256,2], index: 0, kind: input, shape index: {}]
  %s1 = inlined_call_operand.vmem [shape: s32[1,256], index: 1, kind: input, shape index: {}]
  %s2 = inlined_call_operand.vmem [shape: f32[256,1], index: 2, kind: input, shape index: {}]
  %s3 = inlined_call_operand.vmem [shape: bf16[30,33], index: 3, kind: input, shape index: {}]
  %s4 = inlined_call_operand.vmem [shape: bf16[30,2], index: 4, kind: input, shape index: {}]
  %s5 = inlined_call_operand.vmem [shape: f32[33,1], index: 5, kind: input, shape index: {}]
  %s6 = inlined_call_operand.vmem [shape: f32[1,33], index: 6, kind: input, shape index: {}]
  %s7 = inlined_call_operand.vmem [shape: f32[33,1], index: 7, kind: input, shape index: {}]
  %s8 = inlined_call_operand.<no memory space> [shape: f32[1,1], index: 8, kind: input, shape index: {}]
  %s9 = inlined_call_operand.vmem [shape: s32[30,1], index: 9, kind: input, shape index: {}]
  %s10 = inlined_call_operand.vmem [shape: s32[1,30], index: 10, kind: input, shape index: {}]
  %s11 = inlined_call_operand.vmem [shape: f32[33,1], index: 11, kind: input, shape index: {}]
  %s12 = inlined_call_operand.<no memory space> [shape: f32[1,1], index: 12, kind: input, shape index: {}]
  %s13 = inlined_call_operand.vmem [shape: f32[3,1], index: 13, kind: output, shape index: {}]
  %s14 = sld [smem:[#allocation0]]
  $region93: #{tpu_custom_call.1} parent=0
    _
  %s16 = ssub.s32 1, %s14
  %s17 = scalar_select 0, %s16, %s14
  %v18 = vstv %s8
  %19 = vst [vmem:[#allocation3] sm:$0x1] %v18
  %v20 = vstv %s12
  %21 = vst [vmem:[#allocation4] sm:$0x1] %v20
  loop: start=0, step=1, limit=4
  $region2: #{tpu_custom_call.1} parent=0 // loop_pre_header
    _
  $region3: #{tpu_custom_call.1} parent=0 // loop_header
    %s23 = sphi 0, %s27
    %p24 = scmp.ge.s32.totalorder %s23, 4
    %s33 = sphi 0, %s35
    %s36 = sphi 0, %s33
    %s37 = sphi 0, %s36
    %s53 = sphi 0, %s37
    %s59 = sphi 0, %s61
    %s62 = sphi 0, %s59
    %s63 = sphi 0, %s62
    %s79 = sphi 0, %s63
    %s85 = sphi 0, %s87
    %s88 = sphi 0, %s85
    %s89 = sphi 0, %s88
    %s105 = sphi 0, %s89
    %s109 = sphi 0, %s109
    %s111 = sphi 0, %s109
    %s112 = sphi 0, %s111
    %s126 = sphi 0, %s112
    %s130 = sphi 0, %s130
    %s132 = sphi 0, %s130
    %s133 = sphi 0, %s132
    %s147 = sphi 0, %s133
    %s151 = sphi 0, %s151
    %s153 = sphi 0, %s151
    %s154 = sphi 0, %s153
    %s168 = sphi 0, %s154
    %s172 = sphi 0, %s172
    %s174 = sphi 0, %s172
    %s175 = sphi 0, %s174
    %s189 = sphi 0, %s175
    %s193 = sphi 0, %s193
    %s195 = sphi 0, %s193
    %s196 = sphi 0, %s195
    %s210 = sphi 0, %s196
    %s214 = sphi 0, %s214
    %s216 = sphi 0, %s214
    %s217 = sphi 0, %s216
    %s231 = sphi 0, %s217
    %s235 = sphi 0, %s235
    %s237 = sphi 0, %s235
    %s238 = sphi 0, %s237
    %s252 = sphi 0, %s238
    %s256 = sphi 0, %s256
    %s258 = sphi 0, %s256
    %s259 = sphi 0, %s258
    %s273 = sphi 0, %s259
    %s277 = sphi 0, %s277
    %s279 = sphi 0, %s277
    %s280 = sphi 0, %s279
    %s294 = sphi 0, %s280
    %s298 = sphi 0, %s298
    %s300 = sphi 0, %s298
    %s301 = sphi 0, %s300
    %s315 = sphi 0, %s301
    %s319 = sphi 0, %s319
    %s321 = sphi 0, %s319
    %s322 = sphi 0, %s321
    %s336 = sphi 0, %s322
  $region4: #{tpu_custom_call.1} parent=0 // loop_header_branch
    %26 = sbr.rel (%p24) target = $region8
  $region5: #{tpu_custom_call.1} parent=0 // loop_body
    %s28 = ssub.s32 %s23, 1
    %s29 = ssub.s32 %s23, 2
    %s30 = sadd.s32 %s23, 1
    %s31 = ssub.s32 %s23, %s30
    %p32 = scmp.eq.s32.totalorder %s31, 0
    %s34 = sadd.s32 %s33, 1
    %s35 = scalar_select %p32, %s33, %s34
    %p38 = pneg %p32
    %p39 = scmp.eq.s32.totalorder %s23, 1
    %p40 = por %p38, %p39
    %p41 = scmp.ne.s32.totalorder %s33, %s36
    %p42 = scmp.eq.s32.totalorder %s23, 0
    %p43 = por %p41, %p42
    %p44 = scmp.ne.s32.totalorder %s33, %s36
    %p45 = scmp.eq.s32.totalorder %s28, 1
    %p46 = por %p44, %p45
    %p47 = scmp.ne.s32.totalorder %s36, %s37
    %p48 = scmp.eq.s32.totalorder %s28, 0
    %p49 = por %p47, %p48
    %p50 = scmp.ne.s32.totalorder %s36, %s37
    %p51 = scmp.eq.s32.totalorder %s29, 1
    %p52 = por %p50, %p51
    %p54 = scmp.ne.s32.totalorder %s37, %s53
    %p55 = scmp.eq.s32.totalorder %s29, 0
    %p56 = por %p54, %p55
    %s57 = ssub.s32 %s23, %s30
    %p58 = scmp.eq.s32.totalorder %s57, 0
    %s60 = sadd.s32 %s59, 1
    %s61 = scalar_select %p58, %s59, %s60
    %p64 = pneg %p58
    %p65 = scmp.eq.s32.totalorder %s23, 1
    %p66 = por %p64, %p65
    %p67 = scmp.ne.s32.totalorder %s59, %s62
    %p68 = scmp.eq.s32.totalorder %s23, 0
    %p69 = por %p67, %p68
    %p70 = scmp.ne.s32.totalorder %s59, %s62
    %p71 = scmp.eq.s32.totalorder %s28, 1
    %p72 = por %p70, %p71
    %p73 = scmp.ne.s32.totalorder %s62, %s63
    %p74 = scmp.eq.s32.totalorder %s28, 0
    %p75 = por %p73, %p74
    %p76 = scmp.ne.s32.totalorder %s62, %s63
    %p77 = scmp.eq.s32.totalorder %s29, 1
    %p78 = por %p76, %p77
    %p80 = scmp.ne.s32.totalorder %s63, %s79
    %p81 = scmp.eq.s32.totalorder %s29, 0
    %p82 = por %p80, %p81
    %s83 = ssub.s32 %s23, %s30
    %p84 = scmp.eq.s32.totalorder %s83, 0
    %s86 = sadd.s32 %s85, 1
    %s87 = scalar_select %p84, %s85, %s86
    %p90 = pneg %p84
    %p91 = scmp.eq.s32.totalorder %s23, 1
    %p92 = por %p90, %p91
    %p93 = scmp.ne.s32.totalorder %s85, %s88
    %p94 = scmp.eq.s32.totalorder %s23, 0
    %p95 = por %p93, %p94
    %p96 = scmp.ne.s32.totalorder %s85, %s88
    %p97 = scmp.eq.s32.totalorder %s28, 1
    %p98 = por %p96, %p97
    %p99 = scmp.ne.s32.totalorder %s88, %s89
    %p100 = scmp.eq.s32.totalorder %s28, 0
    %p101 = por %p99, %p100
    %p102 = scmp.ne.s32.totalorder %s88, %s89
    %p103 = scmp.eq.s32.totalorder %s29, 1
    %p104 = por %p102, %p103
    %p106 = scmp.ne.s32.totalorder %s89, %s105
    %p107 = scmp.eq.s32.totalorder %s29, 0
    %p108 = por %p106, %p107
    %s110 = sadd.s32 %s109, 1
    %p113 = scmp.eq.s32.totalorder %s23, 1
    %p114 = scmp.ne.s32.totalorder %s109, %s111
    %p115 = scmp.eq.s32.totalorder %s23, 0
    %p116 = por %p114, %p115
    %p117 = scmp.ne.s32.totalorder %s109, %s111
    %p118 = scmp.eq.s32.totalorder %s28, 1
    %p119 = por %p117, %p118
    %p120 = scmp.ne.s32.totalorder %s111, %s112
    %p121 = scmp.eq.s32.totalorder %s28, 0
    %p122 = por %p120, %p121
    %p123 = scmp.ne.s32.totalorder %s111, %s112
    %p124 = scmp.eq.s32.totalorder %s29, 1
    %p125 = por %p123, %p124
    %p127 = scmp.ne.s32.totalorder %s112, %s126
    %p128 = scmp.eq.s32.totalorder %s29, 0
    %p129 = por %p127, %p128
    %s131 = sadd.s32 %s130, 1
    %p134 = scmp.eq.s32.totalorder %s23, 1
    %p135 = scmp.ne.s32.totalorder %s130, %s132
    %p136 = scmp.eq.s32.totalorder %s23, 0
    %p137 = por %p135, %p136
    %p138 = scmp.ne.s32.totalorder %s130, %s132
    %p139 = scmp.eq.s32.totalorder %s28, 1
    %p140 = por %p138, %p139
    %p141 = scmp.ne.s32.totalorder %s132, %s133
    %p142 = scmp.eq.s32.totalorder %s28, 0
    %p143 = por %p141, %p142
    %p144 = scmp.ne.s32.totalorder %s132, %s133
    %p145 = scmp.eq.s32.totalorder %s29, 1
    %p146 = por %p144, %p145
    %p148 = scmp.ne.s32.totalorder %s133, %s147
    %p149 = scmp.eq.s32.totalorder %s29, 0
    %p150 = por %p148, %p149
    %s152 = sadd.s32 %s151, 1
    %p155 = scmp.eq.s32.totalorder %s23, 1
    %p156 = scmp.ne.s32.totalorder %s151, %s153
    %p157 = scmp.eq.s32.totalorder %s23, 0
    %p158 = por %p156, %p157
    %p159 = scmp.ne.s32.totalorder %s151, %s153
    %p160 = scmp.eq.s32.totalorder %s28, 1
    %p161 = por %p159, %p160
    %p162 = scmp.ne.s32.totalorder %s153, %s154
    %p163 = scmp.eq.s32.totalorder %s28, 0
    %p164 = por %p162, %p163
    %p165 = scmp.ne.s32.totalorder %s153, %s154
    %p166 = scmp.eq.s32.totalorder %s29, 1
    %p167 = por %p165, %p166
    %p169 = scmp.ne.s32.totalorder %s154, %s168
    %p170 = scmp.eq.s32.totalorder %s29, 0
    %p171 = por %p169, %p170
    %s173 = sadd.s32 %s172, 1
    %p176 = scmp.eq.s32.totalorder %s23, 1
    %p177 = scmp.ne.s32.totalorder %s172, %s174
    %p178 = scmp.eq.s32.totalorder %s23, 0
    %p179 = por %p177, %p178
    %p180 = scmp.ne.s32.totalorder %s172, %s174
    %p181 = scmp.eq.s32.totalorder %s28, 1
    %p182 = por %p180, %p181
    %p183 = scmp.ne.s32.totalorder %s174, %s175
    %p184 = scmp.eq.s32.totalorder %s28, 0
    %p185 = por %p183, %p184
    %p186 = scmp.ne.s32.totalorder %s174, %s175
    %p187 = scmp.eq.s32.totalorder %s29, 1
    %p188 = por %p186, %p187
    %p190 = scmp.ne.s32.totalorder %s175, %s189
    %p191 = scmp.eq.s32.totalorder %s29, 0
    %p192 = por %p190, %p191
    %s194 = sadd.s32 %s193, 1
    %p197 = scmp.eq.s32.totalorder %s23, 1
    %p198 = scmp.ne.s32.totalorder %s193, %s195
    %p199 = scmp.eq.s32.totalorder %s23, 0
    %p200 = por %p198, %p199
    %p201 = scmp.ne.s32.totalorder %s193, %s195
    %p202 = scmp.eq.s32.totalorder %s28, 1
    %p203 = por %p201, %p202
    %p204 = scmp.ne.s32.totalorder %s195, %s196
    %p205 = scmp.eq.s32.totalorder %s28, 0
    %p206 = por %p204, %p205
    %p207 = scmp.ne.s32.totalorder %s195, %s196
    %p208 = scmp.eq.s32.totalorder %s29, 1
    %p209 = por %p207, %p208
    %p211 = scmp.ne.s32.totalorder %s196, %s210
    %p212 = scmp.eq.s32.totalorder %s29, 0
    %p213 = por %p211, %p212
    %s215 = sadd.s32 %s214, 1
    %p218 = scmp.eq.s32.totalorder %s23, 1
    %p219 = scmp.ne.s32.totalorder %s214, %s216
    %p220 = scmp.eq.s32.totalorder %s23, 0
    %p221 = por %p219, %p220
    %p222 = scmp.ne.s32.totalorder %s214, %s216
    %p223 = scmp.eq.s32.totalorder %s28, 1
    %p224 = por %p222, %p223
    %p225 = scmp.ne.s32.totalorder %s216, %s217
    %p226 = scmp.eq.s32.totalorder %s28, 0
    %p227 = por %p225, %p226
    %p228 = scmp.ne.s32.totalorder %s216, %s217
    %p229 = scmp.eq.s32.totalorder %s29, 1
    %p230 = por %p228, %p229
    %p232 = scmp.ne.s32.totalorder %s217, %s231
    %p233 = scmp.eq.s32.totalorder %s29, 0
    %p234 = por %p232, %p233
    %s236 = sadd.s32 %s235, 1
    %p239 = scmp.eq.s32.totalorder %s23, 1
    %p240 = scmp.ne.s32.totalorder %s235, %s237
    %p241 = scmp.eq.s32.totalorder %s23, 0
    %p242 = por %p240, %p241
    %p243 = scmp.ne.s32.totalorder %s235, %s237
    %p244 = scmp.eq.s32.totalorder %s28, 1
    %p245 = por %p243, %p244
    %p246 = scmp.ne.s32.totalorder %s237, %s238
    %p247 = scmp.eq.s32.totalorder %s28, 0
    %p248 = por %p246, %p247
    %p249 = scmp.ne.s32.totalorder %s237, %s238
    %p250 = scmp.eq.s32.totalorder %s29, 1
    %p251 = por %p249, %p250
    %p253 = scmp.ne.s32.totalorder %s238, %s252
    %p254 = scmp.eq.s32.totalorder %s29, 0
    %p255 = por %p253, %p254
    %s257 = sadd.s32 %s256, 1
    %p260 = scmp.eq.s32.totalorder %s23, 1
    %p261 = scmp.ne.s32.totalorder %s256, %s258
    %p262 = scmp.eq.s32.totalorder %s23, 0
    %p263 = por %p261, %p262
    %p264 = scmp.ne.s32.totalorder %s256, %s258
    %p265 = scmp.eq.s32.totalorder %s28, 1
    %p266 = por %p264, %p265
    %p267 = scmp.ne.s32.totalorder %s258, %s259
    %p268 = scmp.eq.s32.totalorder %s28, 0
    %p269 = por %p267, %p268
    %p270 = scmp.ne.s32.totalorder %s258, %s259
    %p271 = scmp.eq.s32.totalorder %s29, 1
    %p272 = por %p270, %p271
    %p274 = scmp.ne.s32.totalorder %s259, %s273
    %p275 = scmp.eq.s32.totalorder %s29, 0
    %p276 = por %p274, %p275
    %s278 = sadd.s32 %s277, 1
    %p281 = scmp.eq.s32.totalorder %s23, 1
    %p282 = scmp.ne.s32.totalorder %s277, %s279
    %p283 = scmp.eq.s32.totalorder %s23, 0
    %p284 = por %p282, %p283
    %p285 = scmp.ne.s32.totalorder %s277, %s279
    %p286 = scmp.eq.s32.totalorder %s28, 1
    %p287 = por %p285, %p286
    %p288 = scmp.ne.s32.totalorder %s279, %s280
    %p289 = scmp.eq.s32.totalorder %s28, 0
    %p290 = por %p288, %p289
    %p291 = scmp.ne.s32.totalorder %s279, %s280
    %p292 = scmp.eq.s32.totalorder %s29, 1
    %p293 = por %p291, %p292
    %p295 = scmp.ne.s32.totalorder %s280, %s294
    %p296 = scmp.eq.s32.totalorder %s29, 0
    %p297 = por %p295, %p296
    %s299 = sadd.s32 %s298, 1
    %p302 = scmp.eq.s32.totalorder %s23, 1
    %p303 = scmp.ne.s32.totalorder %s298, %s300
    %p304 = scmp.eq.s32.totalorder %s23, 0
    %p305 = por %p303, %p304
    %p306 = scmp.ne.s32.totalorder %s298, %s300
    %p307 = scmp.eq.s32.totalorder %s28, 1
    %p308 = por %p306, %p307
    %p309 = scmp.ne.s32.totalorder %s300, %s301
    %p310 = scmp.eq.s32.totalorder %s28, 0
    %p311 = por %p309, %p310
    %p312 = scmp.ne.s32.totalorder %s300, %s301
    %p313 = scmp.eq.s32.totalorder %s29, 1
    %p314 = por %p312, %p313
    %p316 = scmp.ne.s32.totalorder %s301, %s315
    %p317 = scmp.eq.s32.totalorder %s29, 0
    %p318 = por %p316, %p317
    %s320 = sadd.s32 %s319, 1
    %p323 = scmp.eq.s32.totalorder %s23, 1
    %p324 = scmp.ne.s32.totalorder %s319, %s321
    %p325 = scmp.eq.s32.totalorder %s23, 0
    %p326 = por %p324, %p325
    %p327 = scmp.ne.s32.totalorder %s319, %s321
    %p328 = scmp.eq.s32.totalorder %s28, 1
    %p329 = por %p327, %p328
    %p330 = scmp.ne.s32.totalorder %s321, %s322
    %p331 = scmp.eq.s32.totalorder %s28, 0
    %p332 = por %p330, %p331
    %p333 = scmp.ne.s32.totalorder %s321, %s322
    %p334 = scmp.eq.s32.totalorder %s29, 1
    %p335 = por %p333, %p334
    %p337 = scmp.ne.s32.totalorder %s322, %s336
    %p338 = scmp.eq.s32.totalorder %s29, 0
    %p339 = por %p337, %p338
    %p340 = scmp.le.s32.totalorder 1, %s23
    %p341 = scmp.lt.s32.totalorder %s23, 3
    %p342 = pnand %p340, %p341
    %p343 = pneg %p342
    // Predicated region
    $region9: #{tpu_custom_call.1} parent=5 // pred_check
      _
    $region10: #{tpu_custom_call.1} parent=5 // pred_check_branch
      %345 = sbr.rel (%p342) target = $region12
    $region11: #{tpu_custom_call.1} parent=5 // pred_region
      %s346 = ssub.s32 %s23, 1
      // Predicated region
      $region13: #{tpu_custom_call.1} parent=11 // pred_check
        %p347 = pneg %p122
      $region14: #{tpu_custom_call.1} parent=11 // pred_check_branch
        %349 = sbr.rel (%p347) target = $region16
      $region15: #{tpu_custom_call.1} parent=11 // pred_region
        _
      $region16: #{tpu_custom_call.1} parent=11 // pred_fallthru
        _
      // Predicated region
      $region17: #{tpu_custom_call.1} parent=11 // pred_check
        %p350 = pneg %p143
      $region18: #{tpu_custom_call.1} parent=11 // pred_check_branch
        %352 = sbr.rel (%p350) target = $region20
      $region19: #{tpu_custom_call.1} parent=11 // pred_region
        _
      $region20: #{tpu_custom_call.1} parent=11 // pred_fallthru
        _
      // Predicated region
      $region21: #{tpu_custom_call.1} parent=11 // pred_check
        %p353 = pneg %p164
      $region22: #{tpu_custom_call.1} parent=11 // pred_check_branch
        %355 = sbr.rel (%p353) target = $region24
      $region23: #{tpu_custom_call.1} parent=11 // pred_region
        _
      $region24: #{tpu_custom_call.1} parent=11 // pred_fallthru
        _
      // Predicated region
      $region25: #{tpu_custom_call.1} parent=11 // pred_check
        %p356 = pneg %p185
      $region26: #{tpu_custom_call.1} parent=11 // pred_check_branch
        %358 = sbr.rel (%p356) target = $region28
      $region27: #{tpu_custom_call.1} parent=11 // pred_region
        _
      $region28: #{tpu_custom_call.1} parent=11 // pred_fallthru
        _
      // Predicated region
      $region29: #{tpu_custom_call.1} parent=11 // pred_check
        %p359 = pneg %p206
      $region30: #{tpu_custom_call.1} parent=11 // pred_check_branch
        %361 = sbr.rel (%p359) target = $region32
      $region31: #{tpu_custom_call.1} parent=11 // pred_region
        _
      $region32: #{tpu_custom_call.1} parent=11 // pred_fallthru
        _
      // Predicated region
      $region33: #{tpu_custom_call.1} parent=11 // pred_check
        %p362 = pneg %p227
      $region34: #{tpu_custom_call.1} parent=11 // pred_check_branch
        %364 = sbr.rel (%p362) target = $region36
      $region35: #{tpu_custom_call.1} parent=11 // pred_region
        _
      $region36: #{tpu_custom_call.1} parent=11 // pred_fallthru
        _
      // Predicated region
      $region37: #{tpu_custom_call.1} parent=11 // pred_check
        %p365 = pneg %p248
      $region38: #{tpu_custom_call.1} parent=11 // pred_check_branch
        %367 = sbr.rel (%p365) target = $region40
      $region39: #{tpu_custom_call.1} parent=11 // pred_region
        _
      $region40: #{tpu_custom_call.1} parent=11 // pred_fallthru
        _
      // Predicated region
      $region41: #{tpu_custom_call.1} parent=11 // pred_check
        %p368 = pneg %p269
      $region42: #{tpu_custom_call.1} parent=11 // pred_check_branch
        %370 = sbr.rel (%p368) target = $region44
      $region43: #{tpu_custom_call.1} parent=11 // pred_region
        _
      $region44: #{tpu_custom_call.1} parent=11 // pred_fallthru
        _
      // Predicated region
      $region45: #{tpu_custom_call.1} parent=11 // pred_check
        %p371 = pneg %p290
      $region46: #{tpu_custom_call.1} parent=11 // pred_check_branch
        %373 = sbr.rel (%p371) target = $region48
      $region47: #{tpu_custom_call.1} parent=11 // pred_region
        _
      $region48: #{tpu_custom_call.1} parent=11 // pred_fallthru
        _
      // Predicated region
      $region49: #{tpu_custom_call.1} parent=11 // pred_check
        %p374 = pneg %p311
      $region50: #{tpu_custom_call.1} parent=11 // pred_check_branch
        %376 = sbr.rel (%p374) target = $region52
      $region51: #{tpu_custom_call.1} parent=11 // pred_region
        _
      $region52: #{tpu_custom_call.1} parent=11 // pred_fallthru
        _
    $region12: #{tpu_custom_call.1} parent=5 // pred_fallthru
      _
    %p377 = scmp.lt.s32.totalorder %s23, 2
    // Predicated region
    $region53: #{tpu_custom_call.1} parent=5 // pred_check
      %p378 = pneg %p377
    $region54: #{tpu_custom_call.1} parent=5 // pred_check_branch
      %380 = sbr.rel (%p378) target = $region56
    $region55: #{tpu_custom_call.1} parent=5 // pred_region
      // Predicated region
      $region57: #{tpu_custom_call.1} parent=55 // pred_check
        %p381 = pneg %p43
      $region58: #{tpu_custom_call.1} parent=55 // pred_check_branch
        %383 = sbr.rel (%p381) target = $region60
      $region59: #{tpu_custom_call.1} parent=55 // pred_region
        %s384 = smul.u32 16, %s23
        %p385 = scmp.lt.s32.totalorder %s384, 31
        %s386 = scalar_select %p385, %s384, 31
        %s387 = smul.addr %s386, 8
        %s388 = scalar_lea.vmem %s0, %s387
        %s389 = smul.u32 16, %s23
      $region60: #{tpu_custom_call.1} parent=55 // pred_fallthru
        _
      // Predicated region
      $region61: #{tpu_custom_call.1} parent=55 // pred_check
        %p390 = pneg %p69
      $region62: #{tpu_custom_call.1} parent=55 // pred_check_branch
        %392 = sbr.rel (%p390) target = $region64
      $region63: #{tpu_custom_call.1} parent=55 // pred_region
        %p393 = scmp.lt.s32.totalorder %s23, 1
        %s394 = scalar_select %p393, %s23, 1
        %s395 = scalar_lea.vmem %s1, %s394
      $region64: #{tpu_custom_call.1} parent=55 // pred_fallthru
        _
      // Predicated region
      $region65: #{tpu_custom_call.1} parent=55 // pred_check
        %p396 = pneg %p95
      $region66: #{tpu_custom_call.1} parent=55 // pred_check_branch
        %398 = sbr.rel (%p396) target = $region68
      $region67: #{tpu_custom_call.1} parent=55 // pred_region
        %s399 = smul.u32 16, %s23
        %p400 = scmp.lt.s32.totalorder %s399, 31
        %s401 = scalar_select %p400, %s399, 31
        %s402 = smul.addr %s401, 8
        %s403 = scalar_lea.vmem %s2, %s402
        %s404 = smul.u32 16, %s23
      $region68: #{tpu_custom_call.1} parent=55 // pred_fallthru
        _
    $region56: #{tpu_custom_call.1} parent=5 // pred_fallthru
      _
    %p405 = scmp.le.s32.totalorder 1, %s23
    %p406 = scmp.lt.s32.totalorder %s23, 3
    %p407 = pnand %p405, %p406
    %p408 = pneg %p407
    // Predicated region
    $region69: #{tpu_custom_call.1} parent=5 // pred_check
      _
    $region70: #{tpu_custom_call.1} parent=5 // pred_check_branch
      %410 = sbr.rel (%p407) target = $region72
    $region71: #{tpu_custom_call.1} parent=5 // pred_region
      %s411 = ssub.s32 %s23, 1
      %s412 = smul.u32 16, %s28
      %p413 = scmp.lt.s32.totalorder %s412, 31
      %s414 = scalar_select %p413, %s412, 31
      %s415 = smul.addr %s414, 8
      %s416 = scalar_lea.vmem %s0, %s415
      %p417 = pneg %p49
      %p418 = pneg %p46
      %p419 = scmp.lt.s32.totalorder %s28, 1
      %s420 = scalar_select %p419, %s28, 1
      %s421 = scalar_lea.vmem %s1, %s420
      %p422 = pneg %p75
      %p423 = pneg %p72
      %s424 = smul.u32 16, %s28
      %p425 = scmp.lt.s32.totalorder %s424, 31
      %s426 = scalar_select %p425, %s424, 31
      %s427 = smul.addr %s426, 8
      %s428 = scalar_lea.vmem %s2, %s427
      %p429 = pneg %p101
      %p430 = pneg %p98
      %p431 = pneg %p122
      %p432 = pneg %p119
      %p433 = pneg %p143
      %p434 = pneg %p140
      %p435 = pneg %p164
      %p436 = pneg %p161
      %p437 = pneg %p185
      %p438 = pneg %p182
      %p439 = pneg %p206
      %p440 = pneg %p203
      %p441 = pneg %p227
      %p442 = pneg %p224
      %p443 = pneg %p248
      %p444 = pneg %p245
      %p445 = pneg %p269
      %p446 = pneg %p266
      %p447 = pneg %p290
      %p448 = pneg %p287
      %p449 = pneg %p311
      %p450 = pneg %p308
      %p451 = pneg %p332
      %p452 = pneg %p329
      %s453 = smul.u32 16, %s28
      %p454 = scmp.lt.s32.totalorder %s453, 31
      %s455 = scalar_select %p454, %s453, 31
      %s456 = smul.addr %s455, 8
      %s457 = scalar_lea.vmem %s0, %s456
      %s458 = smul.u32 16, %s28
      %p459 = scmp.lt.s32.totalorder %s28, 1
      %s460 = scalar_select %p459, %s28, 1
      %s461 = scalar_lea.vmem %s1, %s460
      %s462 = smul.u32 16, %s28
      %p463 = scmp.lt.s32.totalorder %s462, 31
      %s464 = scalar_select %p463, %s462, 31
      %s465 = smul.addr %s464, 8
      %s466 = scalar_lea.vmem %s2, %s465
      %s467 = smul.u32 16, %s28
      %p469 = scmp.eq.s32.totalorder %s28, 0
      // Predicated region
      $region73: #{tpu_custom_call.1} parent=71 // pred_check
        %p470 = pneg %p469
      $region74: #{tpu_custom_call.1} parent=71 // pred_check_branch
        %472 = sbr.rel (%p470) target = $region76
      $region75: #{tpu_custom_call.1} parent=71 // pred_region
        %vm473 = vcmask 269312
        %474 = vst.msk [vmem:[#allocation2] sm:$0xff] %vm473, 0.0
        %475 = vst.msk [vmem:[#allocation2 + $0x8] sm:$0xff] %vm473, 0.0
        %476 = vst.msk [vmem:[#allocation2 + $0x10] sm:$0xff] %vm473, 0.0
        %vm477 = vcmask 267264
        %478 = vst.msk [vmem:[#allocation2 + $0x18] sm:$0x3f] %vm477, 0.0
      $region76: #{tpu_custom_call.1} parent=71 // pred_fallthru
        _
      %v479 = vld [vmem:[%s457] sm:$0xff]
      %v480 = vld [vmem:[%s457 + $0x8] sm:$0xff]
      %v481 = vld [vmem:[%s457 + $0x10] sm:$0xff]
      %v482 = vld [vmem:[%s457 + $0x18] sm:$0xff]
      %v483 = vld [vmem:[%s457 + $0x20] sm:$0xff]
      %v484 = vld [vmem:[%s457 + $0x28] sm:$0xff]
      %v485 = vld [vmem:[%s457 + $0x30] sm:$0xff]
      %v486 = vld [vmem:[%s457 + $0x38] sm:$0xff]
      %v487 = vld [vmem:[%s457 + $0x40] sm:$0xff]
      %v488 = vld [vmem:[%s457 + $0x48] sm:$0xff]
      %v489 = vld [vmem:[%s457 + $0x50] sm:$0xff]
      %v490 = vld [vmem:[%s457 + $0x58] sm:$0xff]
      %v491 = vld [vmem:[%s457 + $0x60] sm:$0xff]
      %v492 = vld [vmem:[%s457 + $0x68] sm:$0xff]
      %v493 = vld [vmem:[%s457 + $0x70] sm:$0xff]
      %v494 = vld [vmem:[%s457 + $0x78] sm:$0xff]
      %v495 = vlaneseq
      %v496 = vand.u32 %v495, 127
      %497 = vset.pattern.permute.xlu0 0
      %498 = vperm.xlu0 %497, %v479
      %v499 = vpop.permute.xlu0 %498
      %500 = vset.pattern.permute.xlu0 0
      %501 = vperm.xlu0 %500, %v480
      %v502 = vpop.permute.xlu0 %501
      %503 = vset.pattern.permute.xlu0 0
      %504 = vperm.xlu0 %503, %v481
      %v505 = vpop.permute.xlu0 %504
      %506 = vset.pattern.permute.xlu0 0
      %507 = vperm.xlu0 %506, %v482
      %v508 = vpop.permute.xlu0 %507
      %509 = vset.pattern.permute.xlu0 0
      %510 = vperm.xlu0 %509, %v483
      %v511 = vpop.permute.xlu0 %510
      %512 = vset.pattern.permute.xlu0 0
      %513 = vperm.xlu0 %512, %v484
      %v514 = vpop.permute.xlu0 %513
      %515 = vset.pattern.permute.xlu0 0
      %516 = vperm.xlu0 %515, %v485
      %v517 = vpop.permute.xlu0 %516
      %518 = vset.pattern.permute.xlu0 0
      %519 = vperm.xlu0 %518, %v486
      %v520 = vpop.permute.xlu0 %519
      %521 = vset.pattern.permute.xlu0 0
      %522 = vperm.xlu0 %521, %v487
      %v523 = vpop.permute.xlu0 %522
      %524 = vset.pattern.permute.xlu0 0
      %525 = vperm.xlu0 %524, %v488
      %v526 = vpop.permute.xlu0 %525
      %527 = vset.pattern.permute.xlu0 0
      %528 = vperm.xlu0 %527, %v489
      %v529 = vpop.permute.xlu0 %528
      %530 = vset.pattern.permute.xlu0 0
      %531 = vperm.xlu0 %530, %v490
      %v532 = vpop.permute.xlu0 %531
      %533 = vset.pattern.permute.xlu0 0
      %534 = vperm.xlu0 %533, %v491
      %v535 = vpop.permute.xlu0 %534
      %536 = vset.pattern.permute.xlu0 0
      %537 = vperm.xlu0 %536, %v492
      %v538 = vpop.permute.xlu0 %537
      %539 = vset.pattern.permute.xlu0 0
      %540 = vperm.xlu0 %539, %v493
      %v541 = vpop.permute.xlu0 %540
      %542 = vset.pattern.permute.xlu0 0
      %543 = vperm.xlu0 %542, %v494
      %v544 = vpop.permute.xlu0 %543
      %vm545 = vcmp.eq.s32.totalorder %v499, %v496
      %vm546 = vcmp.eq.s32.totalorder %v502, %v496
      %vm547 = vcmp.eq.s32.totalorder %v505, %v496
      %vm548 = vcmp.eq.s32.totalorder %v508, %v496
      %vm549 = vcmp.eq.s32.totalorder %v511, %v496
      %vm550 = vcmp.eq.s32.totalorder %v514, %v496
      %vm551 = vcmp.eq.s32.totalorder %v517, %v496
      %vm552 = vcmp.eq.s32.totalorder %v520, %v496
      %vm553 = vcmp.eq.s32.totalorder %v523, %v496
      %vm554 = vcmp.eq.s32.totalorder %v526, %v496
      %vm555 = vcmp.eq.s32.totalorder %v529, %v496
      %vm556 = vcmp.eq.s32.totalorder %v532, %v496
      %vm557 = vcmp.eq.s32.totalorder %v535, %v496
      %vm558 = vcmp.eq.s32.totalorder %v538, %v496
      %vm559 = vcmp.eq.s32.totalorder %v541, %v496
      %vm560 = vcmp.eq.s32.totalorder %v544, %v496
      %v561 = vsel %vm545, 1, 0
      %v562 = vsel %vm546, 1, 0
      %v563 = vsel %vm547, 1, 0
      %v564 = vsel %vm548, 1, 0
      %v565 = vsel %vm549, 1, 0
      %v566 = vsel %vm550, 1, 0
      %v567 = vsel %vm551, 1, 0
      %v568 = vsel %vm552, 1, 0
      %v569 = vsel %vm553, 1, 0
      %v570 = vsel %vm554, 1, 0
      %v571 = vsel %vm555, 1, 0
      %v572 = vsel %vm556, 1, 0
      %v573 = vsel %vm557, 1, 0
      %v574 = vsel %vm558, 1, 0
      %v575 = vsel %vm559, 1, 0
      %v576 = vsel %vm560, 1, 0
      %v577 = vcvt.s32.f32 %v561
      %v578 = vcvt.s32.f32 %v562
      %v579 = vcvt.s32.f32 %v563
      %v580 = vcvt.s32.f32 %v564
      %v581 = vcvt.s32.f32 %v565
      %v582 = vcvt.s32.f32 %v566
      %v583 = vcvt.s32.f32 %v567
      %v584 = vcvt.s32.f32 %v568
      %v585 = vcvt.s32.f32 %v569
      %v586 = vcvt.s32.f32 %v570
      %v587 = vcvt.s32.f32 %v571
      %v588 = vcvt.s32.f32 %v572
      %v589 = vcvt.s32.f32 %v573
      %v590 = vcvt.s32.f32 %v574
      %v591 = vcvt.s32.f32 %v575
      %v592 = vcvt.s32.f32 %v576
      %v593 = vpack.c.bf16 %v578, %v577
      %v594 = vpack.c.bf16 %v580, %v579
      %v595 = vpack.c.bf16 %v582, %v581
      %v596 = vpack.c.bf16 %v584, %v583
      %v597 = vpack.c.bf16 %v586, %v585
      %v598 = vpack.c.bf16 %v588, %v587
      %v599 = vpack.c.bf16 %v590, %v589
      %v600 = vpack.c.bf16 %v592, %v591
      %601 = vset.pattern.permute.xlu0 1
      %602 = vperm.xlu0 %601, %v479
      %v603 = vpop.permute.xlu0 %602
      %604 = vset.pattern.permute.xlu0 1
      %605 = vperm.xlu0 %604, %v480
      %v606 = vpop.permute.xlu0 %605
      %607 = vset.pattern.permute.xlu0 1
      %608 = vperm.xlu0 %607, %v481
      %v609 = vpop.permute.xlu0 %608
      %610 = vset.pattern.permute.xlu0 1
      %611 = vperm.xlu0 %610, %v482
      %v612 = vpop.permute.xlu0 %611
      %613 = vset.pattern.permute.xlu0 1
      %614 = vperm.xlu0 %613, %v483
      %v615 = vpop.permute.xlu0 %614
      %616 = vset.pattern.permute.xlu0 1
      %617 = vperm.xlu0 %616, %v484
      %v618 = vpop.permute.xlu0 %617
      %619 = vset.pattern.permute.xlu0 1
      %620 = vperm.xlu0 %619, %v485
      %v621 = vpop.permute.xlu0 %620
      %622 = vset.pattern.permute.xlu0 1
      %623 = vperm.xlu0 %622, %v486
      %v624 = vpop.permute.xlu0 %623
      %625 = vset.pattern.permute.xlu0 1
      %626 = vperm.xlu0 %625, %v487
      %v627 = vpop.permute.xlu0 %626
      %628 = vset.pattern.permute.xlu0 1
      %629 = vperm.xlu0 %628, %v488
      %v630 = vpop.permute.xlu0 %629
      %631 = vset.pattern.permute.xlu0 1
      %632 = vperm.xlu0 %631, %v489
      %v633 = vpop.permute.xlu0 %632
      %634 = vset.pattern.permute.xlu0 1
      %635 = vperm.xlu0 %634, %v490
      %v636 = vpop.permute.xlu0 %635
      %637 = vset.pattern.permute.xlu0 1
      %638 = vperm.xlu0 %637, %v491
      %v639 = vpop.permute.xlu0 %638
      %640 = vset.pattern.permute.xlu0 1
      %641 = vperm.xlu0 %640, %v492
      %v642 = vpop.permute.xlu0 %641
      %643 = vset.pattern.permute.xlu0 1
      %644 = vperm.xlu0 %643, %v493
      %v645 = vpop.permute.xlu0 %644
      %646 = vset.pattern.permute.xlu0 1
      %647 = vperm.xlu0 %646, %v494
      %v648 = vpop.permute.xlu0 %647
      %vm649 = vcmp.eq.s32.totalorder %v603, %v496
      %vm650 = vcmp.eq.s32.totalorder %v606, %v496
      %vm651 = vcmp.eq.s32.totalorder %v609, %v496
      %vm652 = vcmp.eq.s32.totalorder %v612, %v496
      %vm653 = vcmp.eq.s32.totalorder %v615, %v496
      %vm654 = vcmp.eq.s32.totalorder %v618, %v496
      %vm655 = vcmp.eq.s32.totalorder %v621, %v496
      %vm656 = vcmp.eq.s32.totalorder %v624, %v496
      %vm657 = vcmp.eq.s32.totalorder %v627, %v496
      %vm658 = vcmp.eq.s32.totalorder %v630, %v496
      %vm659 = vcmp.eq.s32.totalorder %v633, %v496
      %vm660 = vcmp.eq.s32.totalorder %v636, %v496
      %vm661 = vcmp.eq.s32.totalorder %v639, %v496
      %vm662 = vcmp.eq.s32.totalorder %v642, %v496
      %vm663 = vcmp.eq.s32.totalorder %v645, %v496
      %vm664 = vcmp.eq.s32.totalorder %v648, %v496
      %v665 = vsel %vm649, 1, 0
      %v666 = vsel %vm650, 1, 0
      %v667 = vsel %vm651, 1, 0
      %v668 = vsel %vm652, 1, 0
      %v669 = vsel %vm653, 1, 0
      %v670 = vsel %vm654, 1, 0
      %v671 = vsel %vm655, 1, 0
      %v672 = vsel %vm656, 1, 0
      %v673 = vsel %vm657, 1, 0
      %v674 = vsel %vm658, 1, 0
      %v675 = vsel %vm659, 1, 0
      %v676 = vsel %vm660, 1, 0
      %v677 = vsel %vm661, 1, 0
      %v678 = vsel %vm662, 1, 0
      %v679 = vsel %vm663, 1, 0
      %v680 = vsel %vm664, 1, 0
      %v681 = vcvt.s32.f32 %v665
      %v682 = vcvt.s32.f32 %v666
      %v683 = vcvt.s32.f32 %v667
      %v684 = vcvt.s32.f32 %v668
      %v685 = vcvt.s32.f32 %v669
      %v686 = vcvt.s32.f32 %v670
      %v687 = vcvt.s32.f32 %v671
      %v688 = vcvt.s32.f32 %v672
      %v689 = vcvt.s32.f32 %v673
      %v690 = vcvt.s32.f32 %v674
      %v691 = vcvt.s32.f32 %v675
      %v692 = vcvt.s32.f32 %v676
      %v693 = vcvt.s32.f32 %v677
      %v694 = vcvt.s32.f32 %v678
      %v695 = vcvt.s32.f32 %v679
      %v696 = vcvt.s32.f32 %v680
      %v697 = vpack.c.bf16 %v682, %v681
      %v698 = vpack.c.bf16 %v684, %v683
      %v699 = vpack.c.bf16 %v686, %v685
      %v700 = vpack.c.bf16 %v688, %v687
      %v701 = vpack.c.bf16 %v690, %v689
      %v702 = vpack.c.bf16 %v692, %v691
      %v703 = vpack.c.bf16 %v694, %v693
      %v704 = vpack.c.bf16 %v696, %v695
      %v705 = vlaneseq
      %v706 = vshrl.u32 %v705, 7
      %v707 = vadd.s32 %v706, 8
      %v708 = vadd.s32 %v706, 16
      %v709 = vadd.s32 %v706, 24
      %v710 = vld [vmem:[%s461] sm:$0x1]
      %v711 = vlaneseq
      %v712 = vshrl.u32 %v711, 7
      %v713 = vsub.s32 0, %v712
      %v714 = vrot.slane %v710, %v713
      %vm715 = vcmp.eq.s32.totalorder %v714, %v706
      %vm716 = vcmp.eq.s32.totalorder %v714, %v707
      %vm717 = vcmp.eq.s32.totalorder %v714, %v708
      %vm718 = vcmp.eq.s32.totalorder %v714, %v709
      %v719 = vsel %vm715, 1, 0
      %v720 = vsel %vm716, 1, 0
      %v721 = vsel %vm717, 1, 0
      %v722 = vsel %vm718, 1, 0
      %v723 = vcvt.s32.f32 %v719
      %v724 = vcvt.s32.f32 %v720
      %v725 = vcvt.s32.f32 %v721
      %v726 = vcvt.s32.f32 %v722
      %v727 = vpack.c.bf16 %v724, %v723
      %v728 = vpack.c.bf16 %v726, %v725
      %v729 = vld [vmem:[%s3] sm:$0xf]
      %v730 = vld [vmem:[%s3 + $0x4] sm:$0xf]
      %v731 = vld [vmem:[%s3 + $0x8] sm:$0xf]
      %v732 = vld [vmem:[%s3 + $0xc] sm:$0x7]
      %v737 = vunpack.c.l.b16 %v729
      %v738 = vunpack.c.l.b16 %v730
      %v739 = vunpack.c.l.b16 %v731
      %v740 = vunpack.c.l.b16 %v732
      %v741 = vpack.c.b16 %v738, %v737
      %v742 = vpack.c.b16 %v740, %v739
      %vm744 = vcmask 244736
      %v746 = vsel %vm744, %v593, 0
      %v749 = vsel %vm744, %v594, 0
      %v752 = vsel %vm744, %v595, 0
      %v755 = vsel %vm744, %v596, 0
      %v758 = vsel %vm744, %v597, 0
      %v761 = vsel %vm744, %v598, 0
      %v764 = vsel %vm744, %v599, 0
      %v767 = vsel %vm744, %v600, 0
      %vm769 = vcmask 1046528
      %v771 = vsel %vm769, %v742, 0
      %773 = vmatprep.subr.bf16.mxu0 0
      %774 = vmatpush1.bf16.msra.mxu0 %v741
      %775 = vmatprep.subr.bf16.mxu0 0
      %776 = vmatpush1.bf16.msra.mxu0 %v771
      %777 = vmatprep.subr.bf16.mxu0 0
      %778 = vmatpush1.bf16.msra.mxu0 0
      %779 = vmatprep.subr.bf16.mxu0 0
      %780 = vmatpush1.bf16.msra.mxu0 0
      %781 = vmatprep.subr.bf16.mxu0 0
      %782 = vmatpush1.bf16.msra.mxu0 0
      %783 = vmatprep.subr.bf16.mxu0 0
      %784 = vmatpush1.bf16.msra.mxu0 0
      %785 = vmatprep.subr.bf16.mxu0 0
      %786 = vmatpush1.bf16.msra.mxu0 0
      %787 = vmatprep.subr.bf16.mxu0 0
      %788 = vmatpush1.bf16.msra.mxu0 0
      %789 = vmatprep.subr.bf16.mxu0 0
      %790 = vmatpush1.bf16.msra.mxu0 0
      %791 = vmatprep.subr.bf16.mxu0 0
      %792 = vmatpush1.bf16.msra.mxu0 0
      %793 = vmatprep.subr.bf16.mxu0 0
      %794 = vmatpush1.bf16.msra.mxu0 0
      %795 = vmatprep.subr.bf16.mxu0 0
      %796 = vmatpush1.bf16.msra.mxu0 0
      %797 = vmatprep.subr.bf16.mxu0 0
      %798 = vmatpush1.bf16.msra.mxu0 0
      %799 = vmatprep.subr.bf16.mxu0 0
      %800 = vmatpush1.bf16.msra.mxu0 0
      %801 = vmatprep.subr.bf16.mxu0 0
      %802 = vmatpush1.bf16.msra.mxu0 0
      %803 = vmatprep.subr.bf16.mxu0 0
      %804 = vmatpush1.bf16.msra.mxu0 0
      %805 = vmatprep.mubr.bf16.mxu0 0
      %806 = vmatmul.mubr.bf16.gmra.mrb[0].mxu0 %v746
      %v807 = vpop.f32.mrb[0].mxu0
      %v808 = vadd.f32 0.0, %v807
      %v809 = vpop.f32.mrb[0].mxu0
      %v810 = vpop.f32.mrb[0].mxu0
      %v811 = vadd.f32 0.0, %v810
      %v812 = vpop.f32.mrb[0].mxu0
      %813 = vmatprep.mubr.bf16.mxu0 0
      %814 = vmatmul.mubr.bf16.gmra.mrb[0].mxu0 %v749
      %v815 = vpop.f32.mrb[0].mxu0
      %v816 = vadd.f32 0.0, %v815
      %v817 = vpop.f32.mrb[0].mxu0
      %v818 = vpop.f32.mrb[0].mxu0
      %v819 = vadd.f32 0.0, %v818
      %v820 = vpop.f32.mrb[0].mxu0
      %821 = vmatprep.mubr.bf16.mxu0 0
      %822 = vmatmul.mubr.bf16.gmra.mrb[0].mxu0 %v752
      %v823 = vpop.f32.mrb[0].mxu0
      %v824 = vadd.f32 0.0, %v823
      %v825 = vpop.f32.mrb[0].mxu0
      %v826 = vpop.f32.mrb[0].mxu0
      %v827 = vadd.f32 0.0, %v826
      %v828 = vpop.f32.mrb[0].mxu0
      %829 = vmatprep.mubr.bf16.mxu0 0
      %830 = vmatmul.mubr.bf16.gmra.mrb[0].mxu0 %v755
      %v831 = vpop.f32.mrb[0].mxu0
      %v832 = vadd.f32 0.0, %v831
      %v833 = vpop.f32.mrb[0].mxu0
      %v834 = vpop.f32.mrb[0].mxu0
      %v835 = vadd.f32 0.0, %v834
      %v836 = vpop.f32.mrb[0].mxu0
      %837 = vmatprep.mubr.bf16.mxu0 0
      %838 = vmatmul.mubr.bf16.gmra.mrb[0].mxu0 %v758
      %v839 = vpop.f32.mrb[0].mxu0
      %v840 = vadd.f32 0.0, %v839
      %v841 = vpop.f32.mrb[0].mxu0
      %v842 = vpop.f32.mrb[0].mxu0
      %v843 = vadd.f32 0.0, %v842
      %v844 = vpop.f32.mrb[0].mxu0
      %845 = vmatprep.mubr.bf16.mxu0 0
      %846 = vmatmul.mubr.bf16.gmra.mrb[0].mxu0 %v761
      %v847 = vpop.f32.mrb[0].mxu0
      %v848 = vadd.f32 0.0, %v847
      %v849 = vpop.f32.mrb[0].mxu0
      %v850 = vpop.f32.mrb[0].mxu0
      %v851 = vadd.f32 0.0, %v850
      %v852 = vpop.f32.mrb[0].mxu0
      %853 = vmatprep.mubr.bf16.mxu0 0
      %854 = vmatmul.mubr.bf16.gmra.mrb[0].mxu0 %v764
      %v855 = vpop.f32.mrb[0].mxu0
      %v856 = vadd.f32 0.0, %v855
      %v857 = vpop.f32.mrb[0].mxu0
      %v858 = vpop.f32.mrb[0].mxu0
      %v859 = vadd.f32 0.0, %v858
      %v860 = vpop.f32.mrb[0].mxu0
      %861 = vmatprep.mubr.bf16.mxu0 0
      %862 = vmatmul.mubr.bf16.gmra.mrb[0].mxu0 %v767
      %v863 = vpop.f32.mrb[0].mxu0
      %v864 = vadd.f32 0.0, %v863
      %v865 = vpop.f32.mrb[0].mxu0
      %v866 = vpop.f32.mrb[0].mxu0
      %v867 = vadd.f32 0.0, %v866
      %v868 = vpop.f32.mrb[0].mxu0
      %869 = vdwg.mxu0
      %v870 = vld [vmem:[%s5] sm:$0xff]
      %v871 = vld [vmem:[%s5 + $0x8] sm:$0xff]
      %v872 = vld [vmem:[%s5 + $0x10] sm:$0xff]
      %v873 = vld [vmem:[%s5 + $0x18] sm:$0xff]
      %v874 = vld [vmem:[%s5 + $0x20] sm:$0x1]
      %v875 = vld [vmem:[%s4] sm:$0xf]
      %v876 = vld [vmem:[%s4 + $0x4] sm:$0xf]
      %v877 = vld [vmem:[%s4 + $0x8] sm:$0xf]
      %v878 = vld [vmem:[%s4 + $0xc] sm:$0x7]
      %v883 = vunpack.c.l.b16 %v875
      %v884 = vunpack.c.l.b16 %v876
      %v885 = vunpack.c.l.b16 %v877
      %v886 = vunpack.c.l.b16 %v878
      %v887 = vpack.c.b16 %v884, %v883
      %v888 = vpack.c.b16 %v886, %v885
      %v891 = vsel %vm744, %v697, 0
      %v894 = vsel %vm744, %v698, 0
      %v897 = vsel %vm744, %v699, 0
      %v900 = vsel %vm744, %v700, 0
      %v903 = vsel %vm744, %v701, 0
      %v906 = vsel %vm744, %v702, 0
      %v909 = vsel %vm744, %v703, 0
      %v912 = vsel %vm744, %v704, 0
      %v915 = vsel %vm769, %v888, 0
      %917 = vmatprep.subr.bf16.mxu0 0
      %918 = vmatpush1.bf16.msra.mxu0 %v887
      %919 = vmatprep.subr.bf16.mxu0 0
      %920 = vmatpush1.bf16.msra.mxu0 %v915
      %921 = vmatprep.subr.bf16.mxu0 0
      %922 = vmatpush1.bf16.msra.mxu0 0
      %923 = vmatprep.subr.bf16.mxu0 0
      %924 = vmatpush1.bf16.msra.mxu0 0
      %925 = vmatprep.subr.bf16.mxu0 0
      %926 = vmatpush1.bf16.msra.mxu0 0
      %927 = vmatprep.subr.bf16.mxu0 0
      %928 = vmatpush1.bf16.msra.mxu0 0
      %929 = vmatprep.subr.bf16.mxu0 0
      %930 = vmatpush1.bf16.msra.mxu0 0
      %931 = vmatprep.subr.bf16.mxu0 0
      %932 = vmatpush1.bf16.msra.mxu0 0
      %933 = vmatprep.subr.bf16.mxu0 0
      %934 = vmatpush1.bf16.msra.mxu0 0
      %935 = vmatprep.subr.bf16.mxu0 0
      %936 = vmatpush1.bf16.msra.mxu0 0
      %937 = vmatprep.subr.bf16.mxu0 0
      %938 = vmatpush1.bf16.msra.mxu0 0
      %939 = vmatprep.subr.bf16.mxu0 0
      %940 = vmatpush1.bf16.msra.mxu0 0
      %941 = vmatprep.subr.bf16.mxu0 0
      %942 = vmatpush1.bf16.msra.mxu0 0
      %943 = vmatprep.subr.bf16.mxu0 0
      %944 = vmatpush1.bf16.msra.mxu0 0
      %945 = vmatprep.subr.bf16.mxu0 0
      %946 = vmatpush1.bf16.msra.mxu0 0
      %947 = vmatprep.subr.bf16.mxu0 0
      %948 = vmatpush1.bf16.msra.mxu0 0
      %949 = vmatprep.mubr.bf16.mxu0 0
      %950 = vmatmul.mubr.bf16.gmra.mrb[0].mxu0 %v891
      %v951 = vpop.f32.mrb[0].mxu0
      %v952 = vadd.f32 0.0, %v951
      %v953 = vpop.f32.mrb[0].mxu0
      %v954 = vpop.f32.mrb[0].mxu0
      %v955 = vadd.f32 0.0, %v954
      %v956 = vpop.f32.mrb[0].mxu0
      %957 = vmatprep.mubr.bf16.mxu0 0
      %958 = vmatmul.mubr.bf16.gmra.mrb[0].mxu0 %v894
      %v959 = vpop.f32.mrb[0].mxu0
      %v960 = vadd.f32 0.0, %v959
      %v961 = vpop.f32.mrb[0].mxu0
      %v962 = vpop.f32.mrb[0].mxu0
      %v963 = vadd.f32 0.0, %v962
      %v964 = vpop.f32.mrb[0].mxu0
      %965 = vmatprep.mubr.bf16.mxu0 0
      %966 = vmatmul.mubr.bf16.gmra.mrb[0].mxu0 %v897
      %v967 = vpop.f32.mrb[0].mxu0
      %v968 = vadd.f32 0.0, %v967
      %v969 = vpop.f32.mrb[0].mxu0
      %v970 = vpop.f32.mrb[0].mxu0
      %v971 = vadd.f32 0.0, %v970
      %v972 = vpop.f32.mrb[0].mxu0
      %973 = vmatprep.mubr.bf16.mxu0 0
      %974 = vmatmul.mubr.bf16.gmra.mrb[0].mxu0 %v900
      %v975 = vpop.f32.mrb[0].mxu0
      %v976 = vadd.f32 0.0, %v975
      %v977 = vpop.f32.mrb[0].mxu0
      %v978 = vpop.f32.mrb[0].mxu0
      %v979 = vadd.f32 0.0, %v978
      %v980 = vpop.f32.mrb[0].mxu0
      %981 = vmatprep.mubr.bf16.mxu0 0
      %982 = vmatmul.mubr.bf16.gmra.mrb[0].mxu0 %v903
      %v983 = vpop.f32.mrb[0].mxu0
      %v984 = vadd.f32 0.0, %v983
      %v985 = vpop.f32.mrb[0].mxu0
      %v986 = vpop.f32.mrb[0].mxu0
      %v987 = vadd.f32 0.0, %v986
      %v988 = vpop.f32.mrb[0].mxu0
      %989 = vmatprep.mubr.bf16.mxu0 0
      %990 = vmatmul.mubr.bf16.gmra.mrb[0].mxu0 %v906
      %v991 = vpop.f32.mrb[0].mxu0
      %v992 = vadd.f32 0.0, %v991
      %v993 = vpop.f32.mrb[0].mxu0
      %v994 = vpop.f32.mrb[0].mxu0
      %v995 = vadd.f32 0.0, %v994
      %v996 = vpop.f32.mrb[0].mxu0
      %997 = vmatprep.mubr.bf16.mxu0 0
      %998 = vmatmul.mubr.bf16.gmra.mrb[0].mxu0 %v909
      %v999 = vpop.f32.mrb[0].mxu0
      %v1000 = vadd.f32 0.0, %v999
      %v1001 = vpop.f32.mrb[0].mxu0
      %v1002 = vpop.f32.mrb[0].mxu0
      %v1003 = vadd.f32 0.0, %v1002
      %v1004 = vpop.f32.mrb[0].mxu0
      %1005 = vmatprep.mubr.bf16.mxu0 0
      %1006 = vmatmul.mubr.bf16.gmra.mrb[0].mxu0 %v912
      %v1007 = vpop.f32.mrb[0].mxu0
      %v1008 = vadd.f32 0.0, %v1007
      %v1009 = vpop.f32.mrb[0].mxu0
      %v1010 = vpop.f32.mrb[0].mxu0
      %v1011 = vadd.f32 0.0, %v1010
      %v1012 = vpop.f32.mrb[0].mxu0
      %1013 = vdwg.mxu0
      %vm1014 = vcmask 269312
      %v1016 = vsel %vm1014, %v808, 0
      %v1019 = vsel %vm1014, %v811, 0
      %v1022 = vsel %vm1014, %v816, 0
      %v1025 = vsel %vm1014, %v819, 0
      %v1028 = vsel %vm1014, %v824, 0
      %v1031 = vsel %vm1014, %v827, 0
      %v1034 = vsel %vm1014, %v832, 0
      %v1037 = vsel %vm1014, %v835, 0
      %v1040 = vsel %vm1014, %v840, 0
      %v1043 = vsel %vm1014, %v843, 0
      %v1046 = vsel %vm1014, %v848, 0
      %v1049 = vsel %vm1014, %v851, 0
      %v1052 = vsel %vm1014, %v856, 0
      %v1055 = vsel %vm1014, %v859, 0
      %v1058 = vsel %vm1014, %v864, 0
      %v1061 = vsel %vm1014, %v867, 0
      %vm1063 = vcmask 1040384
      %v1065 = vsel %vm1063, %v874, 0
      %1067 = vmatprep.subr.mxu0 0.0
      %1068 = vmatpush1.msra.mxu0 %v870
      %1069 = vmatprep.subr.mxu0 0.0
      %1070 = vmatpush1.msra.mxu0 %v871
      %1071 = vmatprep.subr.mxu0 0.0
      %1072 = vmatpush1.msra.mxu0 %v872
      %1073 = vmatprep.subr.mxu0 0.0
      %1074 = vmatpush1.msra.mxu0 %v873
      %1075 = vmatprep.subr.mxu0 0.0
      %1076 = vmatpush1.msra.mxu0 %v1065
      %1077 = vmatprep.subr.mxu0 0.0
      %1078 = vmatpush1.msra.mxu0 0.0
      %1079 = vmatprep.subr.mxu0 0.0
      %1080 = vmatpush1.msra.mxu0 0.0
      %1081 = vmatprep.subr.mxu0 0.0
      %1082 = vmatpush1.msra.mxu0 0.0
      %1083 = vmatprep.subr.mxu0 0.0
      %1084 = vmatpush1.msra.mxu0 0.0
      %1085 = vmatprep.subr.mxu0 0.0
      %1086 = vmatpush1.msra.mxu0 0.0
      %1087 = vmatprep.subr.mxu0 0.0
      %1088 = vmatpush1.msra.mxu0 0.0
      %1089 = vmatprep.subr.mxu0 0.0
      %1090 = vmatpush1.msra.mxu0 0.0
      %1091 = vmatprep.subr.mxu0 0.0
      %1092 = vmatpush1.msra.mxu0 0.0
      %1093 = vmatprep.subr.mxu0 0.0
      %1094 = vmatpush1.msra.mxu0 0.0
      %1095 = vmatprep.subr.mxu0 0.0
      %1096 = vmatpush1.msra.mxu0 0.0
      %1097 = vmatprep.subr.mxu0 0.0
      %1098 = vmatpush1.msra.mxu0 0.0
      %1099 = vmatprep.subr.mxu0 0.0
      %1100 = vmatpush1.msra.mxu0 0.0
      %1101 = vmatprep.subr.mxu0 0.0
      %1102 = vmatpush1.msra.mxu0 0.0
      %1103 = vmatprep.subr.mxu0 0.0
      %1104 = vmatpush1.msra.mxu0 0.0
      %1105 = vmatprep.subr.mxu0 0.0
      %1106 = vmatpush1.msra.mxu0 0.0
      %1107 = vmatprep.subr.mxu0 0.0
      %1108 = vmatpush1.msra.mxu0 0.0
      %1109 = vmatprep.subr.mxu0 0.0
      %1110 = vmatpush1.msra.mxu0 0.0
      %1111 = vmatprep.subr.mxu0 0.0
      %1112 = vmatpush1.msra.mxu0 0.0
      %1113 = vmatprep.subr.mxu0 0.0
      %1114 = vmatpush1.msra.mxu0 0.0
      %1115 = vmatprep.subr.mxu0 0.0
      %1116 = vmatpush1.msra.mxu0 0.0
      %1117 = vmatprep.subr.mxu0 0.0
      %1118 = vmatpush1.msra.mxu0 0.0
      %1119 = vmatprep.subr.mxu0 0.0
      %1120 = vmatpush1.msra.mxu0 0.0
      %1121 = vmatprep.subr.mxu0 0.0
      %1122 = vmatpush1.msra.mxu0 0.0
      %1123 = vmatprep.subr.mxu0 0.0
      %1124 = vmatpush1.msra.mxu0 0.0
      %1125 = vmatprep.subr.mxu0 0.0
      %1126 = vmatpush1.msra.mxu0 0.0
      %1127 = vmatprep.subr.mxu0 0.0
      %1128 = vmatpush1.msra.mxu0 0.0
      %1129 = vmatprep.subr.mxu0 0.0
      %1130 = vmatpush1.msra.mxu0 0.0
      %1131 = vmatprep.mubr.f32.mxu0 0.0
      %1132 = vmatmul.mubr.f32.gmra.mrb[0].mxu0 %v1016
      %v1133 = vpop.f32.mrb[0].mxu0
      %v1134 = vadd.f32 %v952, %v1133
      %v1135 = vpop.f32.mrb[0].mxu0
      %1136 = vmatprep.mubr.f32.mxu0 0.0
      %1137 = vmatmul.mubr.f32.gmra.mrb[0].mxu0 %v1019
      %v1138 = vpop.f32.mrb[0].mxu0
      %v1139 = vadd.f32 %v955, %v1138
      %v1140 = vpop.f32.mrb[0].mxu0
      %1141 = vmatprep.mubr.f32.mxu0 0.0
      %1142 = vmatmul.mubr.f32.gmra.mrb[0].mxu0 %v1022
      %v1143 = vpop.f32.mrb[0].mxu0
      %v1144 = vadd.f32 %v960, %v1143
      %v1145 = vpop.f32.mrb[0].mxu0
      %1146 = vmatprep.mubr.f32.mxu0 0.0
      %1147 = vmatmul.mubr.f32.gmra.mrb[0].mxu0 %v1025
      %v1148 = vpop.f32.mrb[0].mxu0
      %v1149 = vadd.f32 %v963, %v1148
      %v1150 = vpop.f32.mrb[0].mxu0
      %1151 = vmatprep.mubr.f32.mxu0 0.0
      %1152 = vmatmul.mubr.f32.gmra.mrb[0].mxu0 %v1028
      %v1153 = vpop.f32.mrb[0].mxu0
      %v1154 = vadd.f32 %v968, %v1153
      %v1155 = vpop.f32.mrb[0].mxu0
      %1156 = vmatprep.mubr.f32.mxu0 0.0
      %1157 = vmatmul.mubr.f32.gmra.mrb[0].mxu0 %v1031
      %v1158 = vpop.f32.mrb[0].mxu0
      %v1159 = vadd.f32 %v971, %v1158
      %v1160 = vpop.f32.mrb[0].mxu0
      %1161 = vmatprep.mubr.f32.mxu0 0.0
      %1162 = vmatmul.mubr.f32.gmra.mrb[0].mxu0 %v1034
      %v1163 = vpop.f32.mrb[0].mxu0
      %v1164 = vadd.f32 %v976, %v1163
      %v1165 = vpop.f32.mrb[0].mxu0
      %1166 = vmatprep.mubr.f32.mxu0 0.0
      %1167 = vmatmul.mubr.f32.gmra.mrb[0].mxu0 %v1037
      %v1168 = vpop.f32.mrb[0].mxu0
      %v1169 = vadd.f32 %v979, %v1168
      %v1170 = vpop.f32.mrb[0].mxu0
      %1171 = vmatprep.mubr.f32.mxu0 0.0
      %1172 = vmatmul.mubr.f32.gmra.mrb[0].mxu0 %v1040
      %v1173 = vpop.f32.mrb[0].mxu0
      %v1174 = vadd.f32 %v984, %v1173
      %v1175 = vpop.f32.mrb[0].mxu0
      %1176 = vmatprep.mubr.f32.mxu0 0.0
      %1177 = vmatmul.mubr.f32.gmra.mrb[0].mxu0 %v1043
      %v1178 = vpop.f32.mrb[0].mxu0
      %v1179 = vadd.f32 %v987, %v1178
      %v1180 = vpop.f32.mrb[0].mxu0
      %1181 = vmatprep.mubr.f32.mxu0 0.0
      %1182 = vmatmul.mubr.f32.gmra.mrb[0].mxu0 %v1046
      %v1183 = vpop.f32.mrb[0].mxu0
      %v1184 = vadd.f32 %v992, %v1183
      %v1185 = vpop.f32.mrb[0].mxu0
      %1186 = vmatprep.mubr.f32.mxu0 0.0
      %1187 = vmatmul.mubr.f32.gmra.mrb[0].mxu0 %v1049
      %v1188 = vpop.f32.mrb[0].mxu0
      %v1189 = vadd.f32 %v995, %v1188
      %v1190 = vpop.f32.mrb[0].mxu0
      %1191 = vmatprep.mubr.f32.mxu0 0.0
      %1192 = vmatmul.mubr.f32.gmra.mrb[0].mxu0 %v1052
      %v1193 = vpop.f32.mrb[0].mxu0
      %v1194 = vadd.f32 %v1000, %v1193
      %v1195 = vpop.f32.mrb[0].mxu0
      %1196 = vmatprep.mubr.f32.mxu0 0.0
      %1197 = vmatmul.mubr.f32.gmra.mrb[0].mxu0 %v1055
      %v1198 = vpop.f32.mrb[0].mxu0
      %v1199 = vadd.f32 %v1003, %v1198
      %v1200 = vpop.f32.mrb[0].mxu0
      %1201 = vmatprep.mubr.f32.mxu0 0.0
      %1202 = vmatmul.mubr.f32.gmra.mrb[0].mxu0 %v1058
      %v1203 = vpop.f32.mrb[0].mxu0
      %v1204 = vadd.f32 %v1008, %v1203
      %v1205 = vpop.f32.mrb[0].mxu0
      %1206 = vmatprep.mubr.f32.mxu0 0.0
      %1207 = vmatmul.mubr.f32.gmra.mrb[0].mxu0 %v1061
      %v1208 = vpop.f32.mrb[0].mxu0
      %v1209 = vadd.f32 %v1011, %v1208
      %v1210 = vpop.f32.mrb[0].mxu0
      %1211 = vdwg.mxu0
      %v1212 = vld [vmem:[%s466] sm:$0xff]
      %v1213 = vld [vmem:[%s466 + $0x8] sm:$0xff]
      %v1214 = vld [vmem:[%s466 + $0x10] sm:$0xff]
      %v1215 = vld [vmem:[%s466 + $0x18] sm:$0xff]
      %v1216 = vld [vmem:[%s466 + $0x20] sm:$0xff]
      %v1217 = vld [vmem:[%s466 + $0x28] sm:$0xff]
      %v1218 = vld [vmem:[%s466 + $0x30] sm:$0xff]
      %v1219 = vld [vmem:[%s466 + $0x38] sm:$0xff]
      %v1220 = vld [vmem:[%s466 + $0x40] sm:$0xff]
      %v1221 = vld [vmem:[%s466 + $0x48] sm:$0xff]
      %v1222 = vld [vmem:[%s466 + $0x50] sm:$0xff]
      %v1223 = vld [vmem:[%s466 + $0x58] sm:$0xff]
      %v1224 = vld [vmem:[%s466 + $0x60] sm:$0xff]
      %v1225 = vld [vmem:[%s466 + $0x68] sm:$0xff]
      %v1226 = vld [vmem:[%s466 + $0x70] sm:$0xff]
      %v1227 = vld [vmem:[%s466 + $0x78] sm:$0xff]
      %v1228 = vadd.f32 %v1134, %v1212
      %v1229 = vadd.f32 %v1139, %v1213
      %v1230 = vadd.f32 %v1144, %v1214
      %v1231 = vadd.f32 %v1149, %v1215
      %v1232 = vadd.f32 %v1154, %v1216
      %v1233 = vadd.f32 %v1159, %v1217
      %v1234 = vadd.f32 %v1164, %v1218
      %v1235 = vadd.f32 %v1169, %v1219
      %v1236 = vadd.f32 %v1174, %v1220
      %v1237 = vadd.f32 %v1179, %v1221
      %v1238 = vadd.f32 %v1184, %v1222
      %v1239 = vadd.f32 %v1189, %v1223
      %v1240 = vadd.f32 %v1194, %v1224
      %v1241 = vadd.f32 %v1199, %v1225
      %v1242 = vadd.f32 %v1204, %v1226
      %v1243 = vadd.f32 %v1209, %v1227
      %vm1244 = vcmp.gt.f32.partialorder %v1228, 0.0
      %vm1245 = vcmp.gt.f32.partialorder %v1229, 0.0
      %vm1246 = vcmp.gt.f32.partialorder %v1230, 0.0
      %vm1247 = vcmp.gt.f32.partialorder %v1231, 0.0
      %vm1248 = vcmp.gt.f32.partialorder %v1232, 0.0
      %vm1249 = vcmp.gt.f32.partialorder %v1233, 0.0
      %vm1250 = vcmp.gt.f32.partialorder %v1234, 0.0
      %vm1251 = vcmp.gt.f32.partialorder %v1235, 0.0
      %vm1252 = vcmp.gt.f32.partialorder %v1236, 0.0
      %vm1253 = vcmp.gt.f32.partialorder %v1237, 0.0
      %vm1254 = vcmp.gt.f32.partialorder %v1238, 0.0
      %vm1255 = vcmp.gt.f32.partialorder %v1239, 0.0
      %vm1256 = vcmp.gt.f32.partialorder %v1240, 0.0
      %vm1257 = vcmp.gt.f32.partialorder %v1241, 0.0
      %vm1258 = vcmp.gt.f32.partialorder %v1242, 0.0
      %vm1259 = vcmp.gt.f32.partialorder %v1243, 0.0
      %v1260 = vmul.f32 %v1228, 0.2
      %v1261 = vmul.f32 %v1229, 0.2
      %v1262 = vmul.f32 %v1230, 0.2
      %v1263 = vmul.f32 %v1231, 0.2
      %v1264 = vmul.f32 %v1232, 0.2
      %v1265 = vmul.f32 %v1233, 0.2
      %v1266 = vmul.f32 %v1234, 0.2
      %v1267 = vmul.f32 %v1235, 0.2
      %v1268 = vmul.f32 %v1236, 0.2
      %v1269 = vmul.f32 %v1237, 0.2
      %v1270 = vmul.f32 %v1238, 0.2
      %v1271 = vmul.f32 %v1239, 0.2
      %v1272 = vmul.f32 %v1240, 0.2
      %v1273 = vmul.f32 %v1241, 0.2
      %v1274 = vmul.f32 %v1242, 0.2
      %v1275 = vmul.f32 %v1243, 0.2
      %v1276 = vsel %vm1244, %v1228, %v1260
      %v1277 = vsel %vm1245, %v1229, %v1261
      %v1278 = vsel %vm1246, %v1230, %v1262
      %v1279 = vsel %vm1247, %v1231, %v1263
      %v1280 = vsel %vm1248, %v1232, %v1264
      %v1281 = vsel %vm1249, %v1233, %v1265
      %v1282 = vsel %vm1250, %v1234, %v1266
      %v1283 = vsel %vm1251, %v1235, %v1267
      %v1284 = vsel %vm1252, %v1236, %v1268
      %v1285 = vsel %vm1253, %v1237, %v1269
      %v1286 = vsel %vm1254, %v1238, %v1270
      %v1287 = vsel %vm1255, %v1239, %v1271
      %v1288 = vsel %vm1256, %v1240, %v1272
      %v1289 = vsel %vm1257, %v1241, %v1273
      %v1290 = vsel %vm1258, %v1242, %v1274
      %v1291 = vsel %vm1259, %v1243, %v1275
      %1308 = vrot.lane.b32.xlu0 %v952, 127
      %v1309 = vpop.permute.xlu0 %1308
      %1310 = vrot.lane.b32.xlu0 %v955, 127
      %v1311 = vpop.permute.xlu0 %1310
      %1312 = vrot.lane.b32.xlu0 %v960, 127
      %v1313 = vpop.permute.xlu0 %1312
      %1314 = vrot.lane.b32.xlu0 %v963, 127
      %v1315 = vpop.permute.xlu0 %1314
      %1316 = vrot.lane.b32.xlu0 %v968, 127
      %v1317 = vpop.permute.xlu0 %1316
      %1318 = vrot.lane.b32.xlu0 %v971, 127
      %v1319 = vpop.permute.xlu0 %1318
      %1320 = vrot.lane.b32.xlu0 %v976, 127
      %v1321 = vpop.permute.xlu0 %1320
      %1322 = vrot.lane.b32.xlu0 %v979, 127
      %v1323 = vpop.permute.xlu0 %1322
      %1324 = vrot.lane.b32.xlu0 %v984, 127
      %v1325 = vpop.permute.xlu0 %1324
      %1326 = vrot.lane.b32.xlu0 %v987, 127
      %v1327 = vpop.permute.xlu0 %1326
      %1328 = vrot.lane.b32.xlu0 %v992, 127
      %v1329 = vpop.permute.xlu0 %1328
      %1330 = vrot.lane.b32.xlu0 %v995, 127
      %v1331 = vpop.permute.xlu0 %1330
      %1332 = vrot.lane.b32.xlu0 %v1000, 127
      %v1333 = vpop.permute.xlu0 %1332
      %1334 = vrot.lane.b32.xlu0 %v1003, 127
      %v1335 = vpop.permute.xlu0 %1334
      %1336 = vrot.lane.b32.xlu0 %v1008, 127
      %v1337 = vpop.permute.xlu0 %1336
      %1338 = vrot.lane.b32.xlu0 %v1011, 127
      %v1339 = vpop.permute.xlu0 %1338
      %v1356 = vsub.f32 %v1276, %v1309
      %v1357 = vsub.f32 %v1277, %v1311
      %v1358 = vsub.f32 %v1278, %v1313
      %v1359 = vsub.f32 %v1279, %v1315
      %v1360 = vsub.f32 %v1280, %v1317
      %v1361 = vsub.f32 %v1281, %v1319
      %v1362 = vsub.f32 %v1282, %v1321
      %v1363 = vsub.f32 %v1283, %v1323
      %v1364 = vsub.f32 %v1284, %v1325
      %v1365 = vsub.f32 %v1285, %v1327
      %v1366 = vsub.f32 %v1286, %v1329
      %v1367 = vsub.f32 %v1287, %v1331
      %v1368 = vsub.f32 %v1288, %v1333
      %v1369 = vsub.f32 %v1289, %v1335
      %v1370 = vsub.f32 %v1290, %v1337
      %v1371 = vsub.f32 %v1291, %v1339
      %v1372 = vmul.f32 %v1356, 1.442695
      %v1373 = vpow.pop %v1372
      %v1374 = vmul.f32 %v1357, 1.442695
      %v1375 = vpow.pop %v1374
      %v1376 = vmul.f32 %v1358, 1.442695
      %v1377 = vpow.pop %v1376
      %v1378 = vmul.f32 %v1359, 1.442695
      %v1379 = vpow.pop %v1378
      %v1380 = vmul.f32 %v1360, 1.442695
      %v1381 = vpow.pop %v1380
      %v1382 = vmul.f32 %v1361, 1.442695
      %v1383 = vpow.pop %v1382
      %v1384 = vmul.f32 %v1362, 1.442695
      %v1385 = vpow.pop %v1384
      %v1386 = vmul.f32 %v1363, 1.442695
      %v1387 = vpow.pop %v1386
      %v1388 = vmul.f32 %v1364, 1.442695
      %v1389 = vpow.pop %v1388
      %v1390 = vmul.f32 %v1365, 1.442695
      %v1391 = vpow.pop %v1390
      %v1392 = vmul.f32 %v1366, 1.442695
      %v1393 = vpow.pop %v1392
      %v1394 = vmul.f32 %v1367, 1.442695
      %v1395 = vpow.pop %v1394
      %v1396 = vmul.f32 %v1368, 1.442695
      %v1397 = vpow.pop %v1396
      %v1398 = vmul.f32 %v1369, 1.442695
      %v1399 = vpow.pop %v1398
      %v1400 = vmul.f32 %v1370, 1.442695
      %v1401 = vpow.pop %v1400
      %v1402 = vmul.f32 %v1371, 1.442695
      %v1403 = vpow.pop %v1402
      %1405 = vset.pattern.permute.xlu0 0
      %1406 = vperm.xlu0 %1405, %v1373
      %v1407 = vpop.permute.xlu0 %1406
      %1410 = vset.pattern.permute.xlu0 0
      %1411 = vperm.xlu0 %1410, %v1375
      %v1412 = vpop.permute.xlu0 %1411
      %1415 = vset.pattern.permute.xlu0 0
      %1416 = vperm.xlu0 %1415, %v1377
      %v1417 = vpop.permute.xlu0 %1416
      %1420 = vset.pattern.permute.xlu0 0
      %1421 = vperm.xlu0 %1420, %v1379
      %v1422 = vpop.permute.xlu0 %1421
      %1425 = vset.pattern.permute.xlu0 0
      %1426 = vperm.xlu0 %1425, %v1381
      %v1427 = vpop.permute.xlu0 %1426
      %1430 = vset.pattern.permute.xlu0 0
      %1431 = vperm.xlu0 %1430, %v1383
      %v1432 = vpop.permute.xlu0 %1431
      %1435 = vset.pattern.permute.xlu0 0
      %1436 = vperm.xlu0 %1435, %v1385
      %v1437 = vpop.permute.xlu0 %1436
      %1440 = vset.pattern.permute.xlu0 0
      %1441 = vperm.xlu0 %1440, %v1387
      %v1442 = vpop.permute.xlu0 %1441
      %1445 = vset.pattern.permute.xlu0 0
      %1446 = vperm.xlu0 %1445, %v1389
      %v1447 = vpop.permute.xlu0 %1446
      %1450 = vset.pattern.permute.xlu0 0
      %1451 = vperm.xlu0 %1450, %v1391
      %v1452 = vpop.permute.xlu0 %1451
      %1455 = vset.pattern.permute.xlu0 0
      %1456 = vperm.xlu0 %1455, %v1393
      %v1457 = vpop.permute.xlu0 %1456
      %1460 = vset.pattern.permute.xlu0 0
      %1461 = vperm.xlu0 %1460, %v1395
      %v1462 = vpop.permute.xlu0 %1461
      %1465 = vset.pattern.permute.xlu0 0
      %1466 = vperm.xlu0 %1465, %v1397
      %v1467 = vpop.permute.xlu0 %1466
      %1470 = vset.pattern.permute.xlu0 0
      %1471 = vperm.xlu0 %1470, %v1399
      %v1472 = vpop.permute.xlu0 %1471
      %1475 = vset.pattern.permute.xlu0 0
      %1476 = vperm.xlu0 %1475, %v1401
      %v1477 = vpop.permute.xlu0 %1476
      %1480 = vset.pattern.permute.xlu0 0
      %1481 = vperm.xlu0 %1480, %v1403
      %v1482 = vpop.permute.xlu0 %1481
      %v1484 = vmul.f32 %v1407, %v808
      %v1485 = vmul.f32 %v1412, %v811
      %v1486 = vmul.f32 %v1417, %v816
      %v1487 = vmul.f32 %v1422, %v819
      %v1488 = vmul.f32 %v1427, %v824
      %v1489 = vmul.f32 %v1432, %v827
      %v1490 = vmul.f32 %v1437, %v832
      %v1491 = vmul.f32 %v1442, %v835
      %v1492 = vmul.f32 %v1447, %v840
      %v1493 = vmul.f32 %v1452, %v843
      %v1494 = vmul.f32 %v1457, %v848
      %v1495 = vmul.f32 %v1462, %v851
      %v1496 = vmul.f32 %v1467, %v856
      %v1497 = vmul.f32 %v1472, %v859
      %v1498 = vmul.f32 %v1477, %v864
      %v1499 = vmul.f32 %v1482, %v867
      %v1500 = vpack.c.bf16 %v1485, %v1484
      %v1501 = vpack.c.bf16 %v1487, %v1486
      %v1502 = vpack.c.bf16 %v1489, %v1488
      %v1503 = vpack.c.bf16 %v1491, %v1490
      %v1504 = vpack.c.bf16 %v1493, %v1492
      %v1505 = vpack.c.bf16 %v1495, %v1494
      %v1506 = vpack.c.bf16 %v1497, %v1496
      %v1507 = vpack.c.bf16 %v1499, %v1498
      %v1508 = vld [vmem:[#allocation2] sm:$0xff]
      %v1509 = vld [vmem:[#allocation2 + $0x8] sm:$0xff]
      %v1510 = vld [vmem:[#allocation2 + $0x10] sm:$0xff]
      %v1511 = vld [vmem:[#allocation2 + $0x18] sm:$0x3f]
      %1512 = vmatprep.subr.bf16.mxu0 0
      %1513 = vmatpush1.bf16.msra.mxu0 %v1500
      %1514 = vmatprep.subr.bf16.mxu0 0
      %1515 = vmatpush1.bf16.msra.mxu0 %v1501
      %1516 = vmatprep.subr.bf16.mxu0 0
      %1517 = vmatpush1.bf16.msra.mxu0 %v1502
      %1518 = vmatprep.subr.bf16.mxu0 0
      %1519 = vmatpush1.bf16.msra.mxu0 %v1503
      %1520 = vmatprep.subr.bf16.mxu0 0
      %1521 = vmatpush1.bf16.msra.mxu0 %v1504
      %1522 = vmatprep.subr.bf16.mxu0 0
      %1523 = vmatpush1.bf16.msra.mxu0 %v1505
      %1524 = vmatprep.subr.bf16.mxu0 0
      %1525 = vmatpush1.bf16.msra.mxu0 %v1506
      %1526 = vmatprep.subr.bf16.mxu0 0
      %1527 = vmatpush1.bf16.msra.mxu0 %v1507
      %1528 = vmatprep.subr.bf16.mxu0 0
      %1529 = vmatpush1.bf16.msra.mxu0 0
      %1530 = vmatprep.subr.bf16.mxu0 0
      %1531 = vmatpush1.bf16.msra.mxu0 0
      %1532 = vmatprep.subr.bf16.mxu0 0
      %1533 = vmatpush1.bf16.msra.mxu0 0
      %1534 = vmatprep.subr.bf16.mxu0 0
      %1535 = vmatpush1.bf16.msra.mxu0 0
      %1536 = vmatprep.subr.bf16.mxu0 0
      %1537 = vmatpush1.bf16.msra.mxu0 0
      %1538 = vmatprep.subr.bf16.mxu0 0
      %1539 = vmatpush1.bf16.msra.mxu0 0
      %1540 = vmatprep.subr.bf16.mxu0 0
      %1541 = vmatpush1.bf16.msra.mxu0 0
      %1542 = vmatprep.subr.bf16.mxu0 0
      %1543 = vmatpush1.bf16.msra.mxu0 0
      %1544 = vmatprep.mubr.bf16.mxu0 0
      %1545 = vmatmul.mubr.bf16.gmra.mrb[0].mxu0 %v727
      %v1546 = vpop.f32.mrb[0].mxu0
      %v1547 = vadd.f32 0.0, %v1546
      %v1548 = vpop.f32.mrb[0].mxu0
      %v1549 = vpop.f32.mrb[0].mxu0
      %v1550 = vadd.f32 0.0, %v1549
      %v1551 = vpop.f32.mrb[0].mxu0
      %1552 = vmatprep.mubr.bf16.mxu0 0
      %1553 = vmatmul.mubr.bf16.gmra.mrb[0].mxu0 %v728
      %v1554 = vpop.f32.mrb[0].mxu0
      %v1555 = vadd.f32 0.0, %v1554
      %v1556 = vpop.f32.mrb[0].mxu0
      %v1557 = vpop.f32.mrb[0].mxu0
      %v1558 = vadd.f32 0.0, %v1557
      %v1559 = vpop.f32.mrb[0].mxu0
      %1560 = vdwg.mxu0
      %v1561 = vadd.f32 %v1508, %v1547
      %v1562 = vadd.f32 %v1509, %v1550
      %v1563 = vadd.f32 %v1510, %v1555
      %v1564 = vadd.f32 %v1511, %v1558
      %1565 = vst.msk [vmem:[#allocation2] sm:$0xff] %vm1014, %v1561
      %1566 = vst.msk [vmem:[#allocation2 + $0x8] sm:$0xff] %vm1014, %v1562
      %1567 = vst.msk [vmem:[#allocation2 + $0x10] sm:$0xff] %vm1014, %v1563
      %vm1568 = vcmask 267264
      %1569 = vst.msk [vmem:[#allocation2 + $0x18] sm:$0x3f] %vm1568, %v1564
      %p1570 = scmp.eq.s32.totalorder %s28, 1
      // Predicated region
      $region77: #{tpu_custom_call.1} parent=71 // pred_check
        %p1571 = pneg %p1570
      $region78: #{tpu_custom_call.1} parent=71 // pred_check_branch
        %1573 = sbr.rel (%p1571) target = $region80
      $region79: #{tpu_custom_call.1} parent=71 // pred_region
        %v1574 = vld [vmem:[#allocation2] sm:$0xff]
        %v1575 = vld [vmem:[#allocation2 + $0x8] sm:$0xff]
        %v1576 = vld [vmem:[#allocation2 + $0x10] sm:$0xff]
        %v1577 = vld [vmem:[#allocation2 + $0x18] sm:$0x3f]
        %v1578 = vmax.f32 %v1574, 1e-20
        %v1579 = vmax.f32 %v1575, 1e-20
        %v1580 = vmax.f32 %v1576, 1e-20
        %v1581 = vmax.f32 %v1577, 1e-20
        %1583 = vset.pattern.permute.xlu0 32
        %1584 = vperm.xlu0 %1583, %v1578
        %v1585 = vpop.permute.xlu0 %1584
        %1588 = vset.pattern.permute.xlu0 32
        %1589 = vperm.xlu0 %1588, %v1579
        %v1590 = vpop.permute.xlu0 %1589
        %1593 = vset.pattern.permute.xlu0 32
        %1594 = vperm.xlu0 %1593, %v1580
        %v1595 = vpop.permute.xlu0 %1594
        %1598 = vset.pattern.permute.xlu0 32
        %1599 = vperm.xlu0 %1598, %v1581
        %v1600 = vpop.permute.xlu0 %1599
        %v1602 = vrcp.pop %v1585
        %v1603 = vmul.f32 %v1574, %v1602
        %v1604 = vrcp.pop %v1590
        %v1605 = vmul.f32 %v1575, %v1604
        %v1606 = vrcp.pop %v1595
        %v1607 = vmul.f32 %v1576, %v1606
        %v1608 = vrcp.pop %v1600
        %v1609 = vmul.f32 %v1577, %v1608
        %v1610 = vld [vmem:[%s6] sm:$0x1]
        %v1612 = vlaneseq
        %v1613 = vshrl.u32 %v1612, 7
        %v1614 = vsub.s32 0, %v1613
        %v1615 = vrot.slane %v1610, %v1614
        %v1617 = vadd.f32 %v1603, %v1615
        %v1618 = vadd.f32 %v1605, %v1615
        %v1619 = vadd.f32 %v1607, %v1615
        %v1620 = vadd.f32 %v1609, %v1615
        %v1621 = vmax.f32 %v1617, 0.0
        %v1622 = vmax.f32 %v1618, 0.0
        %v1623 = vmax.f32 %v1619, 0.0
        %v1624 = vmax.f32 %v1620, 0.0
        %v1625 = vld [vmem:[%s7] sm:$0xff]
        %v1626 = vld [vmem:[%s7 + $0x8] sm:$0xff]
        %v1627 = vld [vmem:[%s7 + $0x10] sm:$0xff]
        %v1628 = vld [vmem:[%s7 + $0x18] sm:$0xff]
        %v1629 = vld [vmem:[%s7 + $0x20] sm:$0x1]
        %v1630 = vld [vmem:[#allocation3] sm:$0x1]
        %v1632 = vlaneseq
        %v1633 = vshrl.u32 %v1632, 7
        %v1634 = vsub.s32 0, %v1633
        %v1635 = vrot.slane %v1630, %v1634
        %v1638 = vsel %vm1014, %v1621, 0
        %v1641 = vsel %vm1014, %v1622, 0
        %v1644 = vsel %vm1014, %v1623, 0
        %v1647 = vsel %vm1014, %v1624, 0
        %v1650 = vsel %vm1063, %v1629, 0
        %1652 = vmatprep.subr.mxu0 0.0
        %1653 = vmatpush1.msra.mxu0 %v1625
        %1654 = vmatprep.subr.mxu0 0.0
        %1655 = vmatpush1.msra.mxu0 %v1626
        %1656 = vmatprep.subr.mxu0 0.0
        %1657 = vmatpush1.msra.mxu0 %v1627
        %1658 = vmatprep.subr.mxu0 0.0
        %1659 = vmatpush1.msra.mxu0 %v1628
        %1660 = vmatprep.subr.mxu0 0.0
        %1661 = vmatpush1.msra.mxu0 %v1650
        %1662 = vmatprep.subr.mxu0 0.0
        %1663 = vmatpush1.msra.mxu0 0.0
        %1664 = vmatprep.subr.mxu0 0.0
        %1665 = vmatpush1.msra.mxu0 0.0
        %1666 = vmatprep.subr.mxu0 0.0
        %1667 = vmatpush1.msra.mxu0 0.0
        %1668 = vmatprep.subr.mxu0 0.0
        %1669 = vmatpush1.msra.mxu0 0.0
        %1670 = vmatprep.subr.mxu0 0.0
        %1671 = vmatpush1.msra.mxu0 0.0
        %1672 = vmatprep.subr.mxu0 0.0
        %1673 = vmatpush1.msra.mxu0 0.0
        %1674 = vmatprep.subr.mxu0 0.0
        %1675 = vmatpush1.msra.mxu0 0.0
        %1676 = vmatprep.subr.mxu0 0.0
        %1677 = vmatpush1.msra.mxu0 0.0
        %1678 = vmatprep.subr.mxu0 0.0
        %1679 = vmatpush1.msra.mxu0 0.0
        %1680 = vmatprep.subr.mxu0 0.0
        %1681 = vmatpush1.msra.mxu0 0.0
        %1682 = vmatprep.subr.mxu0 0.0
        %1683 = vmatpush1.msra.mxu0 0.0
        %1684 = vmatprep.subr.mxu0 0.0
        %1685 = vmatpush1.msra.mxu0 0.0
        %1686 = vmatprep.subr.mxu0 0.0
        %1687 = vmatpush1.msra.mxu0 0.0
        %1688 = vmatprep.subr.mxu0 0.0
        %1689 = vmatpush1.msra.mxu0 0.0
        %1690 = vmatprep.subr.mxu0 0.0
        %1691 = vmatpush1.msra.mxu0 0.0
        %1692 = vmatprep.subr.mxu0 0.0
        %1693 = vmatpush1.msra.mxu0 0.0
        %1694 = vmatprep.subr.mxu0 0.0
        %1695 = vmatpush1.msra.mxu0 0.0
        %1696 = vmatprep.subr.mxu0 0.0
        %1697 = vmatpush1.msra.mxu0 0.0
        %1698 = vmatprep.subr.mxu0 0.0
        %1699 = vmatpush1.msra.mxu0 0.0
        %1700 = vmatprep.subr.mxu0 0.0
        %1701 = vmatpush1.msra.mxu0 0.0
        %1702 = vmatprep.subr.mxu0 0.0
        %1703 = vmatpush1.msra.mxu0 0.0
        %1704 = vmatprep.subr.mxu0 0.0
        %1705 = vmatpush1.msra.mxu0 0.0
        %1706 = vmatprep.subr.mxu0 0.0
        %1707 = vmatpush1.msra.mxu0 0.0
        %1708 = vmatprep.subr.mxu0 0.0
        %1709 = vmatpush1.msra.mxu0 0.0
        %1710 = vmatprep.subr.mxu0 0.0
        %1711 = vmatpush1.msra.mxu0 0.0
        %1712 = vmatprep.subr.mxu0 0.0
        %1713 = vmatpush1.msra.mxu0 0.0
        %1714 = vmatprep.subr.mxu0 0.0
        %1715 = vmatpush1.msra.mxu0 0.0
        %1716 = vmatprep.mubr.f32.mxu0 0.0
        %1717 = vmatmul.mubr.f32.gmra.mrb[0].mxu0 %v1638
        %v1718 = vpop.f32.mrb[0].mxu0
        %v1719 = vadd.f32 %v1635, %v1718
        %v1720 = vpop.f32.mrb[0].mxu0
        %1721 = vmatprep.mubr.f32.mxu0 0.0
        %1722 = vmatmul.mubr.f32.gmra.mrb[0].mxu0 %v1641
        %v1723 = vpop.f32.mrb[0].mxu0
        %v1724 = vadd.f32 %v1635, %v1723
        %v1725 = vpop.f32.mrb[0].mxu0
        %1726 = vmatprep.mubr.f32.mxu0 0.0
        %1727 = vmatmul.mubr.f32.gmra.mrb[0].mxu0 %v1644
        %v1728 = vpop.f32.mrb[0].mxu0
        %v1729 = vadd.f32 %v1635, %v1728
        %v1730 = vpop.f32.mrb[0].mxu0
        %1731 = vmatprep.mubr.f32.mxu0 0.0
        %1732 = vmatmul.mubr.f32.gmra.mrb[0].mxu0 %v1647
        %v1733 = vpop.f32.mrb[0].mxu0
        %v1734 = vadd.f32 %v1635, %v1733
        %v1735 = vpop.f32.mrb[0].mxu0
        %1736 = vdwg.mxu0
        %v1737 = vld [vmem:[%s9] sm:$0xff]
        %v1738 = vld [vmem:[%s9 + $0x8] sm:$0xff]
        %v1739 = vld [vmem:[%s9 + $0x10] sm:$0xff]
        %v1740 = vld [vmem:[%s9 + $0x18] sm:$0x3f]
        %1741 = vset.pattern.permute.xlu0 0
        %1742 = vperm.xlu0 %1741, %v1737
        %v1743 = vpop.permute.xlu0 %1742
        %1744 = vset.pattern.permute.xlu0 0
        %1745 = vperm.xlu0 %1744, %v1738
        %v1746 = vpop.permute.xlu0 %1745
        %1747 = vset.pattern.permute.xlu0 0
        %1748 = vperm.xlu0 %1747, %v1739
        %v1749 = vpop.permute.xlu0 %1748
        %1750 = vset.pattern.permute.xlu0 0
        %1751 = vperm.xlu0 %1750, %v1740
        %v1752 = vpop.permute.xlu0 %1751
        %vm1753 = vcmp.eq.s32.totalorder %v1743, %v496
        %vm1754 = vcmp.eq.s32.totalorder %v1746, %v496
        %vm1755 = vcmp.eq.s32.totalorder %v1749, %v496
        %vm1756 = vcmp.eq.s32.totalorder %v1752, %v496
        %1758 = vset.pattern.permute.xlu0 0
        %1759 = vperm.xlu0 %1758, %v1719
        %v1760 = vpop.permute.xlu0 %1759
        %1763 = vset.pattern.permute.xlu0 0
        %1764 = vperm.xlu0 %1763, %v1724
        %v1765 = vpop.permute.xlu0 %1764
        %1768 = vset.pattern.permute.xlu0 0
        %1769 = vperm.xlu0 %1768, %v1729
        %v1770 = vpop.permute.xlu0 %1769
        %1773 = vset.pattern.permute.xlu0 0
        %1774 = vperm.xlu0 %1773, %v1734
        %v1775 = vpop.permute.xlu0 %1774
        %v1777 = vsel %vm1753, %v1760, -1e+30
        %v1778 = vsel %vm1754, %v1765, -1e+30
        %v1779 = vsel %vm1755, %v1770, -1e+30
        %v1780 = vsel %vm1756, %v1775, -1e+30
        %vm1781 = vcmask 23552
        %v1782 = vsel %vm1781, %v1777, -inf
        %v1783 = vsel %vm1781, %v1778, -inf
        %v1784 = vsel %vm1781, %v1779, -inf
        %vm1785 = vcmask 21504
        %v1786 = vsel %vm1785, %v1780, -inf
        %v1787 = vmax.f32 %v1782, %v1783
        %v1788 = vmax.f32 %v1784, %v1786
        %v1789 = vmax.f32 %v1787, %v1788
        %v1790 = vrot.slane %v1789, 4
        %v1791 = vmax.f32 %v1789, %v1790
        %v1792 = vrot.slane %v1791, 2
        %v1793 = vmax.f32 %v1791, %v1792
        %v1794 = vrot.slane %v1793, 1
        %v1795 = vmax.f32 %v1793, %v1794
        %v1796 = vsel %vm1753, %v1795, -1e+30
        %v1797 = vsel %vm1754, %v1795, -1e+30
        %v1798 = vsel %vm1755, %v1795, -1e+30
        %v1799 = vsel %vm1756, %v1795, -1e+30
        %v1800 = vsel %vm1781, %v1796, -inf
        %1801 = vmax.xlane.f32.xlu0 %v1800
        %v1802 = vpop.xlane.xlu0 %1801
        %v1803 = vsel %vm1781, %v1797, -inf
        %1804 = vmax.xlane.f32.xlu0 %v1803
        %v1805 = vpop.xlane.xlu0 %1804
        %v1806 = vsel %vm1781, %v1798, -inf
        %1807 = vmax.xlane.f32.xlu0 %v1806
        %v1808 = vpop.xlane.xlu0 %1807
        %v1809 = vsel %vm1785, %v1799, -inf
        %1810 = vmax.xlane.f32.xlu0 %v1809
        %v1811 = vpop.xlane.xlu0 %1810
        %v1812 = vsub.f32 %v1719, %v1802
        %v1813 = vsub.f32 %v1724, %v1805
        %v1814 = vsub.f32 %v1729, %v1808
        %v1815 = vsub.f32 %v1734, %v1811
        %v1816 = vmul.f32 %v1812, 1.442695
        %v1817 = vpow.pop %v1816
        %v1818 = vmul.f32 %v1813, 1.442695
        %v1819 = vpow.pop %v1818
        %v1820 = vmul.f32 %v1814, 1.442695
        %v1821 = vpow.pop %v1820
        %v1822 = vmul.f32 %v1815, 1.442695
        %v1823 = vpow.pop %v1822
        %v1824 = vld [vmem:[%s10] sm:$0x1]
        %v1825 = vlaneseq
        %v1826 = vshrl.u32 %v1825, 7
        %v1827 = vsub.s32 0, %v1826
        %v1828 = vrot.slane %v1824, %v1827
        %vm1829 = vcmp.eq.s32.totalorder %v1828, %v706
        %v1830 = vsel %vm1829, 1, 0
        %v1831 = vcvt.s32.f32 %v1830
        %v1832 = vpack.c.bf16 %v1831, %v1831
        %1834 = vset.pattern.permute.xlu0 0
        %1835 = vperm.xlu0 %1834, %v1817
        %v1836 = vpop.permute.xlu0 %1835
        %1839 = vset.pattern.permute.xlu0 0
        %1840 = vperm.xlu0 %1839, %v1819
        %v1841 = vpop.permute.xlu0 %1840
        %1844 = vset.pattern.permute.xlu0 0
        %1845 = vperm.xlu0 %1844, %v1821
        %v1846 = vpop.permute.xlu0 %1845
        %1849 = vset.pattern.permute.xlu0 0
        %1850 = vperm.xlu0 %1849, %v1823
        %v1851 = vpop.permute.xlu0 %1850
        %v1853 = vmul.f32 %v1836, %v1621
        %v1854 = vmul.f32 %v1841, %v1622
        %v1855 = vmul.f32 %v1846, %v1623
        %v1856 = vmul.f32 %v1851, %v1624
        %v1857 = vpack.c.bf16 %v1854, %v1853
        %v1858 = vpack.c.bf16 %v1856, %v1855
        %v1860 = vsel %vm744, %v1832, 0
        %v1863 = vsel %vm769, %v1858, 0
        %1865 = vmatprep.subr.bf16.mxu0 0
        %1866 = vmatpush1.bf16.msra.mxu0 %v1857
        %1867 = vmatprep.subr.bf16.mxu0 0
        %1868 = vmatpush1.bf16.msra.mxu0 %v1863
        %1869 = vmatprep.subr.bf16.mxu0 0
        %1870 = vmatpush1.bf16.msra.mxu0 0
        %1871 = vmatprep.subr.bf16.mxu0 0
        %1872 = vmatpush1.bf16.msra.mxu0 0
        %1873 = vmatprep.subr.bf16.mxu0 0
        %1874 = vmatpush1.bf16.msra.mxu0 0
        %1875 = vmatprep.subr.bf16.mxu0 0
        %1876 = vmatpush1.bf16.msra.mxu0 0
        %1877 = vmatprep.subr.bf16.mxu0 0
        %1878 = vmatpush1.bf16.msra.mxu0 0
        %1879 = vmatprep.subr.bf16.mxu0 0
        %1880 = vmatpush1.bf16.msra.mxu0 0
        %1881 = vmatprep.subr.bf16.mxu0 0
        %1882 = vmatpush1.bf16.msra.mxu0 0
        %1883 = vmatprep.subr.bf16.mxu0 0
        %1884 = vmatpush1.bf16.msra.mxu0 0
        %1885 = vmatprep.subr.bf16.mxu0 0
        %1886 = vmatpush1.bf16.msra.mxu0 0
        %1887 = vmatprep.subr.bf16.mxu0 0
        %1888 = vmatpush1.bf16.msra.mxu0 0
        %1889 = vmatprep.subr.bf16.mxu0 0
        %1890 = vmatpush1.bf16.msra.mxu0 0
        %1891 = vmatprep.subr.bf16.mxu0 0
        %1892 = vmatpush1.bf16.msra.mxu0 0
        %1893 = vmatprep.subr.bf16.mxu0 0
        %1894 = vmatpush1.bf16.msra.mxu0 0
        %1895 = vmatprep.subr.bf16.mxu0 0
        %1896 = vmatpush1.bf16.msra.mxu0 0
        %1897 = vmatprep.mubr.bf16.mxu0 0
        %1898 = vmatmul.mubr.bf16.gmra.mrb[0].mxu0 %v1860
        %v1899 = vpop.f32.mrb[0].mxu0
        %v1900 = vadd.f32 0.0, %v1899
        %v1901 = vpop.f32.mrb[0].mxu0
        %v1902 = vpop.f32.mrb[0].mxu0
        %v1903 = vpop.f32.mrb[0].mxu0
        %1904 = vdwg.mxu0
        %v1905 = vmax.f32 %v1900, 1e-20
        %1907 = vset.pattern.permute.xlu0 32
        %1908 = vperm.xlu0 %1907, %v1905
        %v1909 = vpop.permute.xlu0 %1908
        %v1911 = vrcp.pop %v1909
        %v1912 = vmul.f32 %v1900, %v1911
        %v1913 = vld [vmem:[%s11] sm:$0xff]
        %v1914 = vld [vmem:[%s11 + $0x8] sm:$0xff]
        %v1915 = vld [vmem:[%s11 + $0x10] sm:$0xff]
        %v1916 = vld [vmem:[%s11 + $0x18] sm:$0xff]
        %v1917 = vld [vmem:[%s11 + $0x20] sm:$0x1]
        %v1918 = vld [vmem:[#allocation4] sm:$0x1]
        %v1920 = vlaneseq
        %v1921 = vshrl.u32 %v1920, 7
        %v1922 = vsub.s32 0, %v1921
        %v1923 = vrot.slane %v1918, %v1922
        %v1926 = vsel %vm1014, %v1912, 0
        %v1929 = vsel %vm1063, %v1917, 0
        %1931 = vmatprep.subr.mxu0 0.0
        %1932 = vmatpush1.msra.mxu0 %v1913
        %1933 = vmatprep.subr.mxu0 0.0
        %1934 = vmatpush1.msra.mxu0 %v1914
        %1935 = vmatprep.subr.mxu0 0.0
        %1936 = vmatpush1.msra.mxu0 %v1915
        %1937 = vmatprep.subr.mxu0 0.0
        %1938 = vmatpush1.msra.mxu0 %v1916
        %1939 = vmatprep.subr.mxu0 0.0
        %1940 = vmatpush1.msra.mxu0 %v1929
        %1941 = vmatprep.subr.mxu0 0.0
        %1942 = vmatpush1.msra.mxu0 0.0
        %1943 = vmatprep.subr.mxu0 0.0
        %1944 = vmatpush1.msra.mxu0 0.0
        %1945 = vmatprep.subr.mxu0 0.0
        %1946 = vmatpush1.msra.mxu0 0.0
        %1947 = vmatprep.subr.mxu0 0.0
        %1948 = vmatpush1.msra.mxu0 0.0
        %1949 = vmatprep.subr.mxu0 0.0
        %1950 = vmatpush1.msra.mxu0 0.0
        %1951 = vmatprep.subr.mxu0 0.0
        %1952 = vmatpush1.msra.mxu0 0.0
        %1953 = vmatprep.subr.mxu0 0.0
        %1954 = vmatpush1.msra.mxu0 0.0
        %1955 = vmatprep.subr.mxu0 0.0
        %1956 = vmatpush1.msra.mxu0 0.0
        %1957 = vmatprep.subr.mxu0 0.0
        %1958 = vmatpush1.msra.mxu0 0.0
        %1959 = vmatprep.subr.mxu0 0.0
        %1960 = vmatpush1.msra.mxu0 0.0
        %1961 = vmatprep.subr.mxu0 0.0
        %1962 = vmatpush1.msra.mxu0 0.0
        %1963 = vmatprep.subr.mxu0 0.0
        %1964 = vmatpush1.msra.mxu0 0.0
        %1965 = vmatprep.subr.mxu0 0.0
        %1966 = vmatpush1.msra.mxu0 0.0
        %1967 = vmatprep.subr.mxu0 0.0
        %1968 = vmatpush1.msra.mxu0 0.0
        %1969 = vmatprep.subr.mxu0 0.0
        %1970 = vmatpush1.msra.mxu0 0.0
        %1971 = vmatprep.subr.mxu0 0.0
        %1972 = vmatpush1.msra.mxu0 0.0
        %1973 = vmatprep.subr.mxu0 0.0
        %1974 = vmatpush1.msra.mxu0 0.0
        %1975 = vmatprep.subr.mxu0 0.0
        %1976 = vmatpush1.msra.mxu0 0.0
        %1977 = vmatprep.subr.mxu0 0.0
        %1978 = vmatpush1.msra.mxu0 0.0
        %1979 = vmatprep.subr.mxu0 0.0
        %1980 = vmatpush1.msra.mxu0 0.0
        %1981 = vmatprep.subr.mxu0 0.0
        %1982 = vmatpush1.msra.mxu0 0.0
        %1983 = vmatprep.subr.mxu0 0.0
        %1984 = vmatpush1.msra.mxu0 0.0
        %1985 = vmatprep.subr.mxu0 0.0
        %1986 = vmatpush1.msra.mxu0 0.0
        %1987 = vmatprep.subr.mxu0 0.0
        %1988 = vmatpush1.msra.mxu0 0.0
        %1989 = vmatprep.subr.mxu0 0.0
        %1990 = vmatpush1.msra.mxu0 0.0
        %1991 = vmatprep.subr.mxu0 0.0
        %1992 = vmatpush1.msra.mxu0 0.0
        %1993 = vmatprep.subr.mxu0 0.0
        %1994 = vmatpush1.msra.mxu0 0.0
        %1995 = vmatprep.mubr.f32.mxu0 0.0
        %1996 = vmatmul.mubr.f32.gmra.mrb[0].mxu0 %v1926
        %v1997 = vpop.f32.mrb[0].mxu0
        %v1998 = vadd.f32 %v1923, %v1997
        %v1999 = vpop.f32.mrb[0].mxu0
        %2000 = vdwg.mxu0
        %vm2001 = vcmask 2048
        %2002 = vst.msk [vmem:[%s13] sm:$0x7] %vm2001, %v1998
      $region80: #{tpu_custom_call.1} parent=71 // pred_fallthru
        _
      // Predicated region
      $region81: #{tpu_custom_call.1} parent=71 // pred_check
        %p2003 = pneg %p329
      $region82: #{tpu_custom_call.1} parent=71 // pred_check_branch
        %2005 = sbr.rel (%p2003) target = $region84
      $region83: #{tpu_custom_call.1} parent=71 // pred_region
        _
      $region84: #{tpu_custom_call.1} parent=71 // pred_fallthru
        _
      // Predicated region
      $region85: #{tpu_custom_call.1} parent=71 // pred_check
        %p2006 = pneg %p329
      $region86: #{tpu_custom_call.1} parent=71 // pred_check_branch
        %2008 = sbr.rel (%p2006) target = $region88
      $region87: #{tpu_custom_call.1} parent=71 // pred_region
        _
      $region88: #{tpu_custom_call.1} parent=71 // pred_fallthru
        _
    $region72: #{tpu_custom_call.1} parent=5 // pred_fallthru
      _
    %p2009 = scmp.le.s32.totalorder 2, %s23
    // Predicated region
    $region89: #{tpu_custom_call.1} parent=5 // pred_check
      %p2010 = pneg %p2009
    $region90: #{tpu_custom_call.1} parent=5 // pred_check_branch
      %2012 = sbr.rel (%p2010) target = $region92
    $region91: #{tpu_custom_call.1} parent=5 // pred_region
      %s2013 = ssub.s32 %s23, 2
    $region92: #{tpu_custom_call.1} parent=5 // pred_fallthru
      _
  $region6: #{tpu_custom_call.1} parent=0 // loop_footer
    %s27 = sadd.s32 1, %s23
  $region7: #{tpu_custom_call.1} parent=0 // loop_footer_branch
    %22 = sbr.rel target = $region3
  $region8: #{tpu_custom_call.1} parent=0 // loop_exit
    _

</llo_original>
